<compile_context>
chip_gen: v5e
topology: v5e:2x2
jax: 0.10.0
libtpu: 0.0.40
codegen_flags: <defaults>
</compile_context>

<pallas_src>
import jax
import jax.numpy as jnp
import numpy as np
from jax.experimental import pallas as pl
from jax.experimental.pallas import tpu as pltpu


def _round_up(n, m):
    return (n + m - 1) // m * m


def _channel_gate_kernel(x_ref, w1_ref, b1_ref, w2_ref, b2_ref, scale_ref):
    f32 = jnp.float32
    x = x_ref[...]                                    # (TB, C_pad, HW) f32

    # Spatial pooling over the full (H*W) window (lane-axis reduce -> XLU).
    avg = jnp.sum(x, axis=-1) * (1.0 / x.shape[-1])   # (TB, C_pad)
    mx = jnp.max(x, axis=-1)                          # (TB, C_pad)

    # Stack both pooled branches so the shared MLP runs as ONE dot per layer.
    pooled = jnp.concatenate([avg, mx], axis=0)       # (2*TB, C_pad)

    wd = w1_ref.dtype                                 # f32 or bf16 at the MXU only
    hid = jnp.dot(pooled.astype(wd), w1_ref[...], preferred_element_type=f32)
    hid = jnp.maximum(hid + b1_ref[...], 0.0)         # (2*TB, Cr_pad), f32 VPU math
    att = jnp.dot(hid.astype(wd), w2_ref[...], preferred_element_type=f32)
    att = att + b2_ref[...]                           # (2*TB, C_pad)

    tb = scale_ref.shape[0]
    channel_att_sum = att[:tb] + att[tb:]             # avg-branch + max-branch
    scale_ref[...] = jax.nn.sigmoid(channel_att_sum)  # lane-dense (TB, C_pad) store


def channel_gate(x, w1, b1, w2, b2, *, block_b=128, mxu_dtype=jnp.float32):
    """ChannelGate forward.

    x : (B, C, H, W) input features.
    w1: (C, Cr)  first Linear weight (stored transposed, i.e. (in, out)).
    b1: (Cr,)    first Linear bias.
    w2: (Cr, C)  second Linear weight (transposed).
    b2: (C,)     second Linear bias.
    Returns scale of shape (B, C, 1, 1) == sigmoid(mlp(avg)+mlp(max)).

    For the real-size configuration (C=2048 on v5e/v6e, or VMEM-tight v7x) pass
    mxu_dtype=jnp.bfloat16: weights are stored/loaded in bf16 and only cast at
    the dot boundary, accumulation stays f32.
    """
    B, C, H, W = x.shape
    Cr = w1.shape[1]
    HW = H * W
    f32 = jnp.float32

    # Lane-dense / sublane-aligned padding.
    C_pad = _round_up(C, 128)
    Cr_pad = _round_up(Cr, 128)
    TB = min(_round_up(B, 8), _round_up(block_b, 8))
    B_pad = _round_up(B, TB)
    grid = (B_pad // TB,)

    x_p = jnp.zeros((B_pad, C_pad, HW), f32).at[:B, :C, :].set(
        x.reshape(B, C, HW).astype(f32))
    w1_p = jnp.zeros((C_pad, Cr_pad), mxu_dtype).at[:C, :Cr].set(w1.astype(mxu_dtype))
    b1_p = jnp.zeros((1, Cr_pad), f32).at[0, :Cr].set(b1.astype(f32))
    w2_p = jnp.zeros((Cr_pad, C_pad), mxu_dtype).at[:Cr, :C].set(w2.astype(mxu_dtype))
    b2_p = jnp.zeros((1, C_pad), f32).at[0, :C].set(b2.astype(f32))

    itemsize_w = jnp.dtype(mxu_dtype).itemsize
    cost = pl.CostEstimate(
        flops=8 * B_pad * C_pad * Cr_pad + 4 * B_pad * C_pad * HW,
        transcendentals=B_pad * C_pad,
        bytes_accessed=(x_p.size * 4
                        + (w1_p.size + w2_p.size) * itemsize_w
                        + (b1_p.size + b2_p.size) * 4
                        + B_pad * C_pad * 4),
    )

    scale_pad = pl.pallas_call(
        _channel_gate_kernel,
        out_shape=jax.ShapeDtypeStruct((B_pad, C_pad), f32),
        grid=grid,
        in_specs=[
            # Activations: tiled over the batch grid.
            pl.BlockSpec((TB, C_pad, HW), lambda i: (i, 0, 0)),
            # Weights/biases: block 0 for every grid step -> stay VMEM-resident.
            pl.BlockSpec((C_pad, Cr_pad), lambda i: (0, 0)),
            pl.BlockSpec((1, Cr_pad), lambda i: (0, 0)),
            pl.BlockSpec((Cr_pad, C_pad), lambda i: (0, 0)),
            pl.BlockSpec((1, C_pad), lambda i: (0, 0)),
        ],
        out_specs=pl.BlockSpec((TB, C_pad), lambda i: (i, 0)),
        compiler_params=pltpu.CompilerParams(
            dimension_semantics=("parallel",)),
        cost_estimate=cost,
    )(x_p, w1_p, b1_p, w2_p, b2_p)

    # Padded rows/lanes hold sigmoid(garbage) (=0.5); slice them off outside the
    # kernel and restore the PyTorch (B, C, 1, 1) output shape.
    return scale_pad[:B, :C].reshape(B, C, 1, 1)


def channel_gate_reference(x, w1, b1, w2, b2):
    """Independent pure-JAX re-implementation of the PyTorch ChannelGate forward."""
    B, C, H, W = x.shape
    xf = x.astype(jnp.float32)
    avg = jnp.mean(xf, axis=(2, 3))                  # F.avg_pool2d over (H, W)
    mx = jnp.max(xf, axis=(2, 3))                    # F.max_pool2d over (H, W)

    def mlp(p):
        return jnp.maximum(p @ w1 + b1, 0.0) @ w2 + b2

    scale = jax.nn.sigmoid(mlp(avg) + mlp(mx))
    return scale.reshape(B, C, 1, 1)


if __name__ == "__main__":
    # Small shapes consistent with the module: reduction_ratio=16 -> C=32, Cr=2.
    B, C, H, W = 2, 32, 16, 16
    reduction_ratio = 16
    Cr = C // reduction_ratio

    key = jax.random.PRNGKey(0)
    kx, k1, k2, k3, k4 = jax.random.split(key, 5)
    x = jax.random.normal(kx, (B, C, H, W), jnp.float32)
    # nn.Linear parameters, weights stored transposed as (in_features, out_features).
    w1 = 0.1 * jax.random.normal(k1, (C, Cr), jnp.float32)
    b1 = 0.1 * jax.random.normal(k2, (Cr,), jnp.float32)
    w2 = 0.1 * jax.random.normal(k3, (Cr, C), jnp.float32)
    b2 = 0.1 * jax.random.normal(k4, (C,), jnp.float32)

    out = channel_gate(x, w1, b1, w2, b2)
    out = jax.block_until_ready(out)

    ref = channel_gate_reference(x, w1, b1, w2, b2)
    assert out.shape == (B, C, 1, 1)
    np.testing.assert_allclose(np.asarray(out), np.asarray(ref), rtol=2e-5, atol=2e-5)
    print("KERNEL_OK")
</pallas_src>

<mosaic_0001>
module attributes {stable_mosaic.version = 11 : i64} {
  func.func @_channel_gate_kernel(%arg0: i32, %arg1: memref<8x128x256xf32, #tpu.memory_space<vmem>>, %arg2: memref<128x128xf32, #tpu.memory_space<vmem>>, %arg3: memref<1x128xf32, #tpu.memory_space<vmem>>, %arg4: memref<128x128xf32, #tpu.memory_space<vmem>>, %arg5: memref<1x128xf32, #tpu.memory_space<vmem>>, %arg6: memref<8x128xf32, #tpu.memory_space<vmem>>) attributes {dimension_semantics = [#tpu.dimension_semantics<parallel>], iteration_bounds = array<i64: 1>, scalar_prefetch = 0 : i64, scratch_operands = 0 : i64, tpu.core_type = #tpu.core_type<tc>, window_params = [{transform_indices = @transform_0, window_bounds = array<i64: 8, 128, 256>}, {pipeline_mode = #tpu.pipeline_mode<synchronous>, transform_indices = @transform_1, window_bounds = array<i64: 128, 128>}, {pipeline_mode = #tpu.pipeline_mode<synchronous>, transform_indices = @transform_2, window_bounds = array<i64: 1, 128>}, {pipeline_mode = #tpu.pipeline_mode<synchronous>, transform_indices = @transform_3, window_bounds = array<i64: 128, 128>}, {pipeline_mode = #tpu.pipeline_mode<synchronous>, transform_indices = @transform_4, window_bounds = array<i64: 1, 128>}, {transform_indices = @transform_5, window_bounds = array<i64: 8, 128>}]} {
    %c0 = arith.constant 0 : index
    %c0_0 = arith.constant 0 : index
    %c0_1 = arith.constant 0 : index
    %0 = vector.load %arg1[%c0, %c0_0, %c0_1] : memref<8x128x256xf32, #tpu.memory_space<vmem>>, vector<8x128x256xf32>
    %cst = arith.constant dense<0.000000e+00> : vector<8x128xf32>
    %1 = vector.multi_reduction <add>, %0, %cst [2] : vector<8x128x256xf32> to vector<8x128xf32>
    %cst_2 = arith.constant 3.906250e-03 : f32
    %2 = vector.broadcast %cst_2 : f32 to vector<8x128xf32>
    %3 = arith.mulf %1, %2 : vector<8x128xf32>
    %cst_3 = arith.constant dense<0xFF800000> : vector<8x128xf32>
    %4 = vector.multi_reduction <maximumf>, %0, %cst_3 [2] : vector<8x128x256xf32> to vector<8x128xf32>
    %5 = tpu.concatenate %3, %4 in 0 : vector<8x128xf32>, vector<8x128xf32> -> vector<16x128xf32>
    %c0_4 = arith.constant 0 : index
    %c0_5 = arith.constant 0 : index
    %6 = vector.load %arg2[%c0_4, %c0_5] : memref<128x128xf32, #tpu.memory_space<vmem>>, vector<128x128xf32>
    %cst_6 = arith.constant dense<0.000000e+00> : vector<16x128xf32>
    %7 = tpu.matmul %5, %6, %cst_6 {dimension_numbers = #tpu.dot_dimension_numbers<[1], [0], [0], [1], [0, 0, 1, 1], [], []>} : vector<16x128xf32>, vector<128x128xf32>, vector<16x128xf32> -> vector<16x128xf32>
    %c0_7 = arith.constant 0 : index
    %c0_8 = arith.constant 0 : index
    %8 = vector.load %arg3[%c0_7, %c0_8] : memref<1x128xf32, #tpu.memory_space<vmem>>, vector<1x128xf32>
    %9 = vector.broadcast %8 : vector<1x128xf32> to vector<16x128xf32>
    %10 = arith.addf %7, %9 : vector<16x128xf32>
    %cst_9 = arith.constant 0.000000e+00 : f32
    %11 = vector.broadcast %cst_9 : f32 to vector<16x128xf32>
    %12 = arith.maximumf %10, %11 : vector<16x128xf32>
    %c0_10 = arith.constant 0 : index
    %c0_11 = arith.constant 0 : index
    %13 = vector.load %arg4[%c0_10, %c0_11] : memref<128x128xf32, #tpu.memory_space<vmem>>, vector<128x128xf32>
    %cst_12 = arith.constant dense<0.000000e+00> : vector<16x128xf32>
    %14 = tpu.matmul %12, %13, %cst_12 {dimension_numbers = #tpu.dot_dimension_numbers<[1], [0], [0], [1], [0, 0, 1, 1], [], []>} : vector<16x128xf32>, vector<128x128xf32>, vector<16x128xf32> -> vector<16x128xf32>
    %c0_13 = arith.constant 0 : index
    %c0_14 = arith.constant 0 : index
    %15 = vector.load %arg5[%c0_13, %c0_14] : memref<1x128xf32, #tpu.memory_space<vmem>>, vector<1x128xf32>
    %16 = vector.broadcast %15 : vector<1x128xf32> to vector<16x128xf32>
    %17 = arith.addf %14, %16 : vector<16x128xf32>
    %18 = vector.extract_strided_slice %17 {offsets = [0, 0], sizes = [8, 128], strides = [1, 1]} : vector<16x128xf32> to vector<8x128xf32>
    %19 = vector.extract_strided_slice %17 {offsets = [8, 0], sizes = [8, 128], strides = [1, 1]} : vector<16x128xf32> to vector<8x128xf32>
    %20 = arith.addf %18, %19 : vector<8x128xf32>
    %21 = arith.negf %20 : vector<8x128xf32>
    %22 = math.exp %21 : vector<8x128xf32>
    %cst_15 = arith.constant 1.000000e+00 : f32
    %23 = vector.broadcast %cst_15 : f32 to vector<8x128xf32>
    %24 = arith.addf %23, %22 : vector<8x128xf32>
    %25 = arith.divf %23, %24 : vector<8x128xf32>
    %c0_16 = arith.constant 0 : index
    %c0_17 = arith.constant 0 : index
    %26 = vector.load %arg6[%c0_16, %c0_17] : memref<8x128xf32, #tpu.memory_space<vmem>>, vector<8x128xf32>
    tpu.vector_store %arg6[%c0_16, %c0_17], %25 {strides = array<i32>} : memref<8x128xf32, #tpu.memory_space<vmem>>, vector<8x128xf32>,
    return
  }
  func.func @transform_0(%arg0: i32) -> (i32, i32, i32) {
    %c0_i32 = arith.constant 0 : i32
    %c0_i32_0 = arith.constant 0 : i32
    %c0_i32_1 = arith.constant 0 : i32
    return %arg0, %c0_i32, %c0_i32_0 : i32, i32, i32
  }
  func.func @transform_1(%arg0: i32) -> (i32, i32) {
    %c0_i32 = arith.constant 0 : i32
    %c0_i32_0 = arith.constant 0 : i32
    %c0_i32_1 = arith.constant 0 : i32
    return %c0_i32, %c0_i32_0 : i32, i32
  }
  func.func @transform_2(%arg0: i32) -> (i32, i32) {
    %c0_i32 = arith.constant 0 : i32
    %c0_i32_0 = arith.constant 0 : i32
    %c0_i32_1 = arith.constant 0 : i32
    return %c0_i32, %c0_i32_0 : i32, i32
  }
  func.func @transform_3(%arg0: i32) -> (i32, i32) {
    %c0_i32 = arith.constant 0 : i32
    %c0_i32_0 = arith.constant 0 : i32
    %c0_i32_1 = arith.constant 0 : i32
    return %c0_i32, %c0_i32_0 : i32, i32
  }
  func.func @transform_4(%arg0: i32) -> (i32, i32) {
    %c0_i32 = arith.constant 0 : i32
    %c0_i32_0 = arith.constant 0 : i32
    %c0_i32_1 = arith.constant 0 : i32
    return %c0_i32, %c0_i32_0 : i32, i32
  }
  func.func @transform_5(%arg0: i32) -> (i32, i32) {
    %c0_i32 = arith.constant 0 : i32
    %c0_i32_0 = arith.constant 0 : i32
    return %arg0, %c0_i32 : i32, i32
  }
}

</mosaic_0001>

<llo_original>
// kernel: tpu_custom_call.1
$region0: #{tpu_custom_call.1}
  #allocation0 [shape = 'u32[]', space=smem, size = 0x4, offset = 0x4, fixed_abs, tag = 'smem constant byte address 0x4 - core index']
  #allocation1 [shape = 'u32[72,128]{1,0:T(1,128)}', space=vmem, size = 0x9000, scoped, tag = 'internal scratch']
  %s0 = inlined_call_operand.hbm [shape: f32[8,128,256], index: 0, kind: input, shape index: {}]
  %s1 = inlined_call_operand.hbm [shape: f32[128,128], index: 1, kind: input, shape index: {}]
  %s2 = inlined_call_operand.vmem [shape: f32[1,128], index: 2, kind: input, shape index: {}]
  %s3 = inlined_call_operand.hbm [shape: f32[128,128], index: 3, kind: input, shape index: {}]
  %s4 = inlined_call_operand.vmem [shape: f32[1,128], index: 4, kind: input, shape index: {}]
  %s5 = inlined_call_operand.hbm [shape: f32[8,128], index: 5, kind: output, shape index: {}]
  %s6 = sld [smem:[#allocation0]]
  $region42: #{tpu_custom_call.1} parent=0
    _
  %s8 = ssub.s32 1, %s6
  %s9 = scalar_select 0, %s8, %s6
  $region1: #{tpu_custom_call.1} parent=0
    #allocation2 [shape = 'u8[1048576]{0}', space=vmem, size = 0x100000, scoped, tag = 'input window, operand 0, single buffered']
    #allocation3 [shape = 's32[1]{0}', space=sflag, size = 0x4, scoped, tag = 'scoped memory for tpu_custom_call.1']
    #allocation4 [shape = 's32[1]{0}', space=sflag, size = 0x4, scoped, tag = 'scoped memory for tpu_custom_call.1']
    #allocation5 [shape = 'u8[65536]{0}', space=vmem, size = 0x10000, scoped, tag = 'input window, operand 1, single buffered']
    #allocation6 [shape = 's32[1]{0}', space=sflag, size = 0x4, scoped, tag = 'scoped memory for tpu_custom_call.1']
    #allocation7 [shape = 'u8[65536]{0}', space=vmem, size = 0x10000, scoped, tag = 'input window, operand 3, single buffered']
    #allocation8 [shape = 'u8[4096]{0}', space=vmem, size = 0x1000, scoped, tag = 'output window, operand 0, single buffered']
    %10 = vsyncpa [#allocation3], 0
    %11 = vsyncpa [#allocation6], 0
    %12 = vsyncpa [#allocation4], 0
    // Predicated region
    $region2: #{tpu_custom_call.1} parent=1 // pred_check
      _
    $region3: #{tpu_custom_call.1} parent=1 // pred_check_branch
      %14 = sbr.rel (0) target = $region5
    $region4: #{tpu_custom_call.1} parent=1 // pred_region
      %16 = vsyncadd [#allocation3], 0
      %s17 = sshll.u32 %s0, 4
      %s18 = int_to_ptr.hbm [resolvable:$true] %s17
      %s19 = sshll.u32 [#allocation2], 4
      %s20 = int_to_ptr.vmem [resolvable:$true] %s19
      %25 = dma.hbm_to_vmem [thread:$0]  %s18, 32768, %s20, [#allocation3], 256, 256, 16
    $region5: #{tpu_custom_call.1} parent=1 // pred_fallthru
      _
    // Predicated region
    $region6: #{tpu_custom_call.1} parent=1 // pred_check
      _
    $region7: #{tpu_custom_call.1} parent=1 // pred_check_branch
      %27 = sbr.rel (0) target = $region9
    $region8: #{tpu_custom_call.1} parent=1 // pred_region
      %29 = vsyncadd [#allocation6], 0
      %s30 = sshll.u32 %s1, 4
      %s31 = int_to_ptr.hbm [resolvable:$true] %s30
      %s32 = sshll.u32 [#allocation5], 4
      %s33 = int_to_ptr.vmem [resolvable:$true] %s32
      %38 = dma.hbm_to_vmem [thread:$0]  %s31, 2048, %s33, [#allocation6], 128, 128, 8
    $region9: #{tpu_custom_call.1} parent=1 // pred_fallthru
      _
    // Predicated region
    $region10: #{tpu_custom_call.1} parent=1 // pred_check
      _
    $region11: #{tpu_custom_call.1} parent=1 // pred_check_branch
      %40 = sbr.rel (0) target = $region13
    $region12: #{tpu_custom_call.1} parent=1 // pred_region
      _
    $region13: #{tpu_custom_call.1} parent=1 // pred_fallthru
      _
    // Predicated region
    $region14: #{tpu_custom_call.1} parent=1 // pred_check
      _
    $region15: #{tpu_custom_call.1} parent=1 // pred_check_branch
      %42 = sbr.rel (0) target = $region17
    $region16: #{tpu_custom_call.1} parent=1 // pred_region
      %44 = vsyncadd [#allocation6], 0
      %s45 = sshll.u32 %s3, 4
      %s46 = int_to_ptr.hbm [resolvable:$true] %s45
      %s47 = sshll.u32 [#allocation7], 4
      %s48 = int_to_ptr.vmem [resolvable:$true] %s47
      %53 = dma.hbm_to_vmem [thread:$0]  %s46, 2048, %s48, [#allocation6], 128, 128, 8
    $region17: #{tpu_custom_call.1} parent=1 // pred_fallthru
      _
    // Predicated region
    $region18: #{tpu_custom_call.1} parent=1 // pred_check
      _
    $region19: #{tpu_custom_call.1} parent=1 // pred_check_branch
      %55 = sbr.rel (0) target = $region21
    $region20: #{tpu_custom_call.1} parent=1 // pred_region
      _
    $region21: #{tpu_custom_call.1} parent=1 // pred_fallthru
      _
    // Predicated region
    $region22: #{tpu_custom_call.1} parent=1 // pred_check
      _
    $region23: #{tpu_custom_call.1} parent=1 // pred_check_branch
      %57 = sbr.rel (0) target = $region25
    $region24: #{tpu_custom_call.1} parent=1 // pred_region
      %59 = dma.done [#allocation3], 32768
    $region25: #{tpu_custom_call.1} parent=1 // pred_fallthru
      _
    // Predicated region
    $region26: #{tpu_custom_call.1} parent=1 // pred_check
      _
    $region27: #{tpu_custom_call.1} parent=1 // pred_check_branch
      %61 = sbr.rel (0) target = $region29
    $region28: #{tpu_custom_call.1} parent=1 // pred_region
      %63 = dma.done [#allocation6], 2048
    $region29: #{tpu_custom_call.1} parent=1 // pred_fallthru
      _
    // Predicated region
    $region30: #{tpu_custom_call.1} parent=1 // pred_check
      _
    $region31: #{tpu_custom_call.1} parent=1 // pred_check_branch
      %65 = sbr.rel (0) target = $region33
    $region32: #{tpu_custom_call.1} parent=1 // pred_region
      %67 = dma.done [#allocation6], 2048
    $region33: #{tpu_custom_call.1} parent=1 // pred_fallthru
      _
    %v68 = vld [vmem:[#allocation2] sm:$0xff]
    %v69 = vld [vmem:[#allocation2 + $0x8] sm:$0xff]
    %v70 = vld [vmem:[#allocation2 + $0x10] sm:$0xff]
    %v71 = vld [vmem:[#allocation2 + $0x18] sm:$0xff]
    %v72 = vld [vmem:[#allocation2 + $0x20] sm:$0xff]
    %v73 = vld [vmem:[#allocation2 + $0x28] sm:$0xff]
    %v74 = vld [vmem:[#allocation2 + $0x30] sm:$0xff]
    %v75 = vld [vmem:[#allocation2 + $0x38] sm:$0xff]
    %v76 = vld [vmem:[#allocation2 + $0x40] sm:$0xff]
    %v77 = vld [vmem:[#allocation2 + $0x48] sm:$0xff]
    %v78 = vld [vmem:[#allocation2 + $0x50] sm:$0xff]
    %v79 = vld [vmem:[#allocation2 + $0x58] sm:$0xff]
    %v80 = vld [vmem:[#allocation2 + $0x60] sm:$0xff]
    %v81 = vld [vmem:[#allocation2 + $0x68] sm:$0xff]
    %v82 = vld [vmem:[#allocation2 + $0x70] sm:$0xff]
    %v83 = vld [vmem:[#allocation2 + $0x78] sm:$0xff]
    %v84 = vld [vmem:[#allocation2 + $0x80] sm:$0xff]
    %v85 = vld [vmem:[#allocation2 + $0x88] sm:$0xff]
    %v86 = vld [vmem:[#allocation2 + $0x90] sm:$0xff]
    %v87 = vld [vmem:[#allocation2 + $0x98] sm:$0xff]
    %v88 = vld [vmem:[#allocation2 + $0xa0] sm:$0xff]
    %v89 = vld [vmem:[#allocation2 + $0xa8] sm:$0xff]
    %v90 = vld [vmem:[#allocation2 + $0xb0] sm:$0xff]
    %v91 = vld [vmem:[#allocation2 + $0xb8] sm:$0xff]
    %v92 = vld [vmem:[#allocation2 + $0xc0] sm:$0xff]
    %v93 = vld [vmem:[#allocation2 + $0xc8] sm:$0xff]
    %v94 = vld [vmem:[#allocation2 + $0xd0] sm:$0xff]
    %v95 = vld [vmem:[#allocation2 + $0xd8] sm:$0xff]
    %v96 = vld [vmem:[#allocation2 + $0xe0] sm:$0xff]
    %v97 = vld [vmem:[#allocation2 + $0xe8] sm:$0xff]
    %v98 = vld [vmem:[#allocation2 + $0xf0] sm:$0xff]
    %v99 = vld [vmem:[#allocation2 + $0xf8] sm:$0xff]
    %v100 = vld [vmem:[#allocation2 + $0x100] sm:$0xff]
    %v101 = vld [vmem:[#allocation2 + $0x108] sm:$0xff]
    %v102 = vld [vmem:[#allocation2 + $0x110] sm:$0xff]
    %v103 = vld [vmem:[#allocation2 + $0x118] sm:$0xff]
    %v104 = vld [vmem:[#allocation2 + $0x120] sm:$0xff]
    %v105 = vld [vmem:[#allocation2 + $0x128] sm:$0xff]
    %v106 = vld [vmem:[#allocation2 + $0x130] sm:$0xff]
    %v107 = vld [vmem:[#allocation2 + $0x138] sm:$0xff]
    %v108 = vld [vmem:[#allocation2 + $0x140] sm:$0xff]
    %v109 = vld [vmem:[#allocation2 + $0x148] sm:$0xff]
    %v110 = vld [vmem:[#allocation2 + $0x150] sm:$0xff]
    %v111 = vld [vmem:[#allocation2 + $0x158] sm:$0xff]
    %v112 = vld [vmem:[#allocation2 + $0x160] sm:$0xff]
    %v113 = vld [vmem:[#allocation2 + $0x168] sm:$0xff]
    %v114 = vld [vmem:[#allocation2 + $0x170] sm:$0xff]
    %v115 = vld [vmem:[#allocation2 + $0x178] sm:$0xff]
    %v116 = vld [vmem:[#allocation2 + $0x180] sm:$0xff]
    %v117 = vld [vmem:[#allocation2 + $0x188] sm:$0xff]
    %v118 = vld [vmem:[#allocation2 + $0x190] sm:$0xff]
    %v119 = vld [vmem:[#allocation2 + $0x198] sm:$0xff]
    %v120 = vld [vmem:[#allocation2 + $0x1a0] sm:$0xff]
    %v121 = vld [vmem:[#allocation2 + $0x1a8] sm:$0xff]
    %v122 = vld [vmem:[#allocation2 + $0x1b0] sm:$0xff]
    %v123 = vld [vmem:[#allocation2 + $0x1b8] sm:$0xff]
    %v124 = vld [vmem:[#allocation2 + $0x1c0] sm:$0xff]
    %v125 = vld [vmem:[#allocation2 + $0x1c8] sm:$0xff]
    %v126 = vld [vmem:[#allocation2 + $0x1d0] sm:$0xff]
    %v127 = vld [vmem:[#allocation2 + $0x1d8] sm:$0xff]
    %v128 = vld [vmem:[#allocation2 + $0x1e0] sm:$0xff]
    %v129 = vld [vmem:[#allocation2 + $0x1e8] sm:$0xff]
    %v130 = vld [vmem:[#allocation2 + $0x1f0] sm:$0xff]
    %v131 = vld [vmem:[#allocation2 + $0x1f8] sm:$0xff]
    %v132 = vld [vmem:[#allocation2 + $0x200] sm:$0xff]
    %v133 = vld [vmem:[#allocation2 + $0x208] sm:$0xff]
    %v134 = vld [vmem:[#allocation2 + $0x210] sm:$0xff]
    %v135 = vld [vmem:[#allocation2 + $0x218] sm:$0xff]
    %v136 = vld [vmem:[#allocation2 + $0x220] sm:$0xff]
    %v137 = vld [vmem:[#allocation2 + $0x228] sm:$0xff]
    %v138 = vld [vmem:[#allocation2 + $0x230] sm:$0xff]
    %v139 = vld [vmem:[#allocation2 + $0x238] sm:$0xff]
    %v140 = vld [vmem:[#allocation2 + $0x240] sm:$0xff]
    %v141 = vld [vmem:[#allocation2 + $0x248] sm:$0xff]
    %v142 = vld [vmem:[#allocation2 + $0x250] sm:$0xff]
    %v143 = vld [vmem:[#allocation2 + $0x258] sm:$0xff]
    %v144 = vld [vmem:[#allocation2 + $0x260] sm:$0xff]
    %v145 = vld [vmem:[#allocation2 + $0x268] sm:$0xff]
    %v146 = vld [vmem:[#allocation2 + $0x270] sm:$0xff]
    %v147 = vld [vmem:[#allocation2 + $0x278] sm:$0xff]
    %v148 = vld [vmem:[#allocation2 + $0x280] sm:$0xff]
    %v149 = vld [vmem:[#allocation2 + $0x288] sm:$0xff]
    %v150 = vld [vmem:[#allocation2 + $0x290] sm:$0xff]
    %v151 = vld [vmem:[#allocation2 + $0x298] sm:$0xff]
    %v152 = vld [vmem:[#allocation2 + $0x2a0] sm:$0xff]
    %v153 = vld [vmem:[#allocation2 + $0x2a8] sm:$0xff]
    %v154 = vld [vmem:[#allocation2 + $0x2b0] sm:$0xff]
    %v155 = vld [vmem:[#allocation2 + $0x2b8] sm:$0xff]
    %v156 = vld [vmem:[#allocation2 + $0x2c0] sm:$0xff]
    %v157 = vld [vmem:[#allocation2 + $0x2c8] sm:$0xff]
    %v158 = vld [vmem:[#allocation2 + $0x2d0] sm:$0xff]
    %v159 = vld [vmem:[#allocation2 + $0x2d8] sm:$0xff]
    %v160 = vld [vmem:[#allocation2 + $0x2e0] sm:$0xff]
    %v161 = vld [vmem:[#allocation2 + $0x2e8] sm:$0xff]
    %v162 = vld [vmem:[#allocation2 + $0x2f0] sm:$0xff]
    %v163 = vld [vmem:[#allocation2 + $0x2f8] sm:$0xff]
    %v164 = vld [vmem:[#allocation2 + $0x300] sm:$0xff]
    %v165 = vld [vmem:[#allocation2 + $0x308] sm:$0xff]
    %v166 = vld [vmem:[#allocation2 + $0x310] sm:$0xff]
    %v167 = vld [vmem:[#allocation2 + $0x318] sm:$0xff]
    %v168 = vld [vmem:[#allocation2 + $0x320] sm:$0xff]
    %v169 = vld [vmem:[#allocation2 + $0x328] sm:$0xff]
    %v170 = vld [vmem:[#allocation2 + $0x330] sm:$0xff]
    %v171 = vld [vmem:[#allocation2 + $0x338] sm:$0xff]
    %v172 = vld [vmem:[#allocation2 + $0x340] sm:$0xff]
    %v173 = vld [vmem:[#allocation2 + $0x348] sm:$0xff]
    %v174 = vld [vmem:[#allocation2 + $0x350] sm:$0xff]
    %v175 = vld [vmem:[#allocation2 + $0x358] sm:$0xff]
    %v176 = vld [vmem:[#allocation2 + $0x360] sm:$0xff]
    %v177 = vld [vmem:[#allocation2 + $0x368] sm:$0xff]
    %v178 = vld [vmem:[#allocation2 + $0x370] sm:$0xff]
    %v179 = vld [vmem:[#allocation2 + $0x378] sm:$0xff]
    %v180 = vld [vmem:[#allocation2 + $0x380] sm:$0xff]
    %v181 = vld [vmem:[#allocation2 + $0x388] sm:$0xff]
    %v182 = vld [vmem:[#allocation2 + $0x390] sm:$0xff]
    %v183 = vld [vmem:[#allocation2 + $0x398] sm:$0xff]
    %v184 = vld [vmem:[#allocation2 + $0x3a0] sm:$0xff]
    %v185 = vld [vmem:[#allocation2 + $0x3a8] sm:$0xff]
    %v186 = vld [vmem:[#allocation2 + $0x3b0] sm:$0xff]
    %v187 = vld [vmem:[#allocation2 + $0x3b8] sm:$0xff]
    %v188 = vld [vmem:[#allocation2 + $0x3c0] sm:$0xff]
    %v189 = vld [vmem:[#allocation2 + $0x3c8] sm:$0xff]
    %v190 = vld [vmem:[#allocation2 + $0x3d0] sm:$0xff]
    %v191 = vld [vmem:[#allocation2 + $0x3d8] sm:$0xff]
    %v192 = vld [vmem:[#allocation2 + $0x3e0] sm:$0xff]
    %v193 = vld [vmem:[#allocation2 + $0x3e8] sm:$0xff]
    %v194 = vld [vmem:[#allocation2 + $0x3f0] sm:$0xff]
    %v195 = vld [vmem:[#allocation2 + $0x3f8] sm:$0xff]
    %v196 = vld [vmem:[#allocation2 + $0x400] sm:$0xff]
    %v197 = vld [vmem:[#allocation2 + $0x408] sm:$0xff]
    %v198 = vld [vmem:[#allocation2 + $0x410] sm:$0xff]
    %v199 = vld [vmem:[#allocation2 + $0x418] sm:$0xff]
    %v200 = vld [vmem:[#allocation2 + $0x420] sm:$0xff]
    %v201 = vld [vmem:[#allocation2 + $0x428] sm:$0xff]
    %v202 = vld [vmem:[#allocation2 + $0x430] sm:$0xff]
    %v203 = vld [vmem:[#allocation2 + $0x438] sm:$0xff]
    %v204 = vld [vmem:[#allocation2 + $0x440] sm:$0xff]
    %v205 = vld [vmem:[#allocation2 + $0x448] sm:$0xff]
    %v206 = vld [vmem:[#allocation2 + $0x450] sm:$0xff]
    %v207 = vld [vmem:[#allocation2 + $0x458] sm:$0xff]
    %v208 = vld [vmem:[#allocation2 + $0x460] sm:$0xff]
    %v209 = vld [vmem:[#allocation2 + $0x468] sm:$0xff]
    %v210 = vld [vmem:[#allocation2 + $0x470] sm:$0xff]
    %v211 = vld [vmem:[#allocation2 + $0x478] sm:$0xff]
    %v212 = vld [vmem:[#allocation2 + $0x480] sm:$0xff]
    %v213 = vld [vmem:[#allocation2 + $0x488] sm:$0xff]
    %v214 = vld [vmem:[#allocation2 + $0x490] sm:$0xff]
    %v215 = vld [vmem:[#allocation2 + $0x498] sm:$0xff]
    %v216 = vld [vmem:[#allocation2 + $0x4a0] sm:$0xff]
    %v217 = vld [vmem:[#allocation2 + $0x4a8] sm:$0xff]
    %v218 = vld [vmem:[#allocation2 + $0x4b0] sm:$0xff]
    %v219 = vld [vmem:[#allocation2 + $0x4b8] sm:$0xff]
    %v220 = vld [vmem:[#allocation2 + $0x4c0] sm:$0xff]
    %v221 = vld [vmem:[#allocation2 + $0x4c8] sm:$0xff]
    %v222 = vld [vmem:[#allocation2 + $0x4d0] sm:$0xff]
    %v223 = vld [vmem:[#allocation2 + $0x4d8] sm:$0xff]
    %v224 = vld [vmem:[#allocation2 + $0x4e0] sm:$0xff]
    %v225 = vld [vmem:[#allocation2 + $0x4e8] sm:$0xff]
    %v226 = vld [vmem:[#allocation2 + $0x4f0] sm:$0xff]
    %v227 = vld [vmem:[#allocation2 + $0x4f8] sm:$0xff]
    %v228 = vld [vmem:[#allocation2 + $0x500] sm:$0xff]
    %v229 = vld [vmem:[#allocation2 + $0x508] sm:$0xff]
    %v230 = vld [vmem:[#allocation2 + $0x510] sm:$0xff]
    %v231 = vld [vmem:[#allocation2 + $0x518] sm:$0xff]
    %v232 = vld [vmem:[#allocation2 + $0x520] sm:$0xff]
    %v233 = vld [vmem:[#allocation2 + $0x528] sm:$0xff]
    %v234 = vld [vmem:[#allocation2 + $0x530] sm:$0xff]
    %v235 = vld [vmem:[#allocation2 + $0x538] sm:$0xff]
    %v236 = vld [vmem:[#allocation2 + $0x540] sm:$0xff]
    %v237 = vld [vmem:[#allocation2 + $0x548] sm:$0xff]
    %v238 = vld [vmem:[#allocation2 + $0x550] sm:$0xff]
    %v239 = vld [vmem:[#allocation2 + $0x558] sm:$0xff]
    %v240 = vld [vmem:[#allocation2 + $0x560] sm:$0xff]
    %v241 = vld [vmem:[#allocation2 + $0x568] sm:$0xff]
    %v242 = vld [vmem:[#allocation2 + $0x570] sm:$0xff]
    %v243 = vld [vmem:[#allocation2 + $0x578] sm:$0xff]
    %v244 = vld [vmem:[#allocation2 + $0x580] sm:$0xff]
    %v245 = vld [vmem:[#allocation2 + $0x588] sm:$0xff]
    %v246 = vld [vmem:[#allocation2 + $0x590] sm:$0xff]
    %v247 = vld [vmem:[#allocation2 + $0x598] sm:$0xff]
    %v248 = vld [vmem:[#allocation2 + $0x5a0] sm:$0xff]
    %v249 = vld [vmem:[#allocation2 + $0x5a8] sm:$0xff]
    %v250 = vld [vmem:[#allocation2 + $0x5b0] sm:$0xff]
    %v251 = vld [vmem:[#allocation2 + $0x5b8] sm:$0xff]
    %v252 = vld [vmem:[#allocation2 + $0x5c0] sm:$0xff]
    %v253 = vld [vmem:[#allocation2 + $0x5c8] sm:$0xff]
    %v254 = vld [vmem:[#allocation2 + $0x5d0] sm:$0xff]
    %v255 = vld [vmem:[#allocation2 + $0x5d8] sm:$0xff]
    %v256 = vld [vmem:[#allocation2 + $0x5e0] sm:$0xff]
    %v257 = vld [vmem:[#allocation2 + $0x5e8] sm:$0xff]
    %v258 = vld [vmem:[#allocation2 + $0x5f0] sm:$0xff]
    %v259 = vld [vmem:[#allocation2 + $0x5f8] sm:$0xff]
    %v260 = vld [vmem:[#allocation2 + $0x600] sm:$0xff]
    %v261 = vld [vmem:[#allocation2 + $0x608] sm:$0xff]
    %v262 = vld [vmem:[#allocation2 + $0x610] sm:$0xff]
    %v263 = vld [vmem:[#allocation2 + $0x618] sm:$0xff]
    %v264 = vld [vmem:[#allocation2 + $0x620] sm:$0xff]
    %v265 = vld [vmem:[#allocation2 + $0x628] sm:$0xff]
    %v266 = vld [vmem:[#allocation2 + $0x630] sm:$0xff]
    %v267 = vld [vmem:[#allocation2 + $0x638] sm:$0xff]
    %v268 = vld [vmem:[#allocation2 + $0x640] sm:$0xff]
    %v269 = vld [vmem:[#allocation2 + $0x648] sm:$0xff]
    %v270 = vld [vmem:[#allocation2 + $0x650] sm:$0xff]
    %v271 = vld [vmem:[#allocation2 + $0x658] sm:$0xff]
    %v272 = vld [vmem:[#allocation2 + $0x660] sm:$0xff]
    %v273 = vld [vmem:[#allocation2 + $0x668] sm:$0xff]
    %v274 = vld [vmem:[#allocation2 + $0x670] sm:$0xff]
    %v275 = vld [vmem:[#allocation2 + $0x678] sm:$0xff]
    %v276 = vld [vmem:[#allocation2 + $0x680] sm:$0xff]
    %v277 = vld [vmem:[#allocation2 + $0x688] sm:$0xff]
    %v278 = vld [vmem:[#allocation2 + $0x690] sm:$0xff]
    %v279 = vld [vmem:[#allocation2 + $0x698] sm:$0xff]
    %v280 = vld [vmem:[#allocation2 + $0x6a0] sm:$0xff]
    %v281 = vld [vmem:[#allocation2 + $0x6a8] sm:$0xff]
    %v282 = vld [vmem:[#allocation2 + $0x6b0] sm:$0xff]
    %v283 = vld [vmem:[#allocation2 + $0x6b8] sm:$0xff]
    %v284 = vld [vmem:[#allocation2 + $0x6c0] sm:$0xff]
    %v285 = vld [vmem:[#allocation2 + $0x6c8] sm:$0xff]
    %v286 = vld [vmem:[#allocation2 + $0x6d0] sm:$0xff]
    %v287 = vld [vmem:[#allocation2 + $0x6d8] sm:$0xff]
    %v288 = vld [vmem:[#allocation2 + $0x6e0] sm:$0xff]
    %v289 = vld [vmem:[#allocation2 + $0x6e8] sm:$0xff]
    %v290 = vld [vmem:[#allocation2 + $0x6f0] sm:$0xff]
    %v291 = vld [vmem:[#allocation2 + $0x6f8] sm:$0xff]
    %v292 = vld [vmem:[#allocation2 + $0x700] sm:$0xff]
    %v293 = vld [vmem:[#allocation2 + $0x708] sm:$0xff]
    %v294 = vld [vmem:[#allocation2 + $0x710] sm:$0xff]
    %v295 = vld [vmem:[#allocation2 + $0x718] sm:$0xff]
    %v296 = vld [vmem:[#allocation2 + $0x720] sm:$0xff]
    %v297 = vld [vmem:[#allocation2 + $0x728] sm:$0xff]
    %v298 = vld [vmem:[#allocation2 + $0x730] sm:$0xff]
    %v299 = vld [vmem:[#allocation2 + $0x738] sm:$0xff]
    %v300 = vld [vmem:[#allocation2 + $0x740] sm:$0xff]
    %v301 = vld [vmem:[#allocation2 + $0x748] sm:$0xff]
    %v302 = vld [vmem:[#allocation2 + $0x750] sm:$0xff]
    %v303 = vld [vmem:[#allocation2 + $0x758] sm:$0xff]
    %v304 = vld [vmem:[#allocation2 + $0x760] sm:$0xff]
    %v305 = vld [vmem:[#allocation2 + $0x768] sm:$0xff]
    %v306 = vld [vmem:[#allocation2 + $0x770] sm:$0xff]
    %v307 = vld [vmem:[#allocation2 + $0x778] sm:$0xff]
    %v308 = vld [vmem:[#allocation2 + $0x780] sm:$0xff]
    %v309 = vld [vmem:[#allocation2 + $0x788] sm:$0xff]
    %v310 = vld [vmem:[#allocation2 + $0x790] sm:$0xff]
    %v311 = vld [vmem:[#allocation2 + $0x798] sm:$0xff]
    %v312 = vld [vmem:[#allocation2 + $0x7a0] sm:$0xff]
    %v313 = vld [vmem:[#allocation2 + $0x7a8] sm:$0xff]
    %v314 = vld [vmem:[#allocation2 + $0x7b0] sm:$0xff]
    %v315 = vld [vmem:[#allocation2 + $0x7b8] sm:$0xff]
    %v316 = vld [vmem:[#allocation2 + $0x7c0] sm:$0xff]
    %v317 = vld [vmem:[#allocation2 + $0x7c8] sm:$0xff]
    %v318 = vld [vmem:[#allocation2 + $0x7d0] sm:$0xff]
    %v319 = vld [vmem:[#allocation2 + $0x7d8] sm:$0xff]
    %v320 = vld [vmem:[#allocation2 + $0x7e0] sm:$0xff]
    %v321 = vld [vmem:[#allocation2 + $0x7e8] sm:$0xff]
    %v322 = vld [vmem:[#allocation2 + $0x7f0] sm:$0xff]
    %v323 = vld [vmem:[#allocation2 + $0x7f8] sm:$0xff]
    %v324 = vadd.f32 %v68, %v69
    %325 = vadd.xlane.f32.xlu0 %v324
    %v326 = vpop.xlane.xlu0 %325
    %v327 = vadd.f32 %v70, %v71
    %328 = vadd.xlane.f32.xlu0 %v327
    %v329 = vpop.xlane.xlu0 %328
    %v330 = vadd.f32 %v72, %v73
    %331 = vadd.xlane.f32.xlu0 %v330
    %v332 = vpop.xlane.xlu0 %331
    %v333 = vadd.f32 %v74, %v75
    %334 = vadd.xlane.f32.xlu0 %v333
    %v335 = vpop.xlane.xlu0 %334
    %v336 = vadd.f32 %v76, %v77
    %337 = vadd.xlane.f32.xlu0 %v336
    %v338 = vpop.xlane.xlu0 %337
    %v339 = vadd.f32 %v78, %v79
    %340 = vadd.xlane.f32.xlu0 %v339
    %v341 = vpop.xlane.xlu0 %340
    %v342 = vadd.f32 %v80, %v81
    %343 = vadd.xlane.f32.xlu0 %v342
    %v344 = vpop.xlane.xlu0 %343
    %v345 = vadd.f32 %v82, %v83
    %346 = vadd.xlane.f32.xlu0 %v345
    %v347 = vpop.xlane.xlu0 %346
    %v348 = vadd.f32 %v84, %v85
    %349 = vadd.xlane.f32.xlu0 %v348
    %v350 = vpop.xlane.xlu0 %349
    %v351 = vadd.f32 %v86, %v87
    %352 = vadd.xlane.f32.xlu0 %v351
    %v353 = vpop.xlane.xlu0 %352
    %v354 = vadd.f32 %v88, %v89
    %355 = vadd.xlane.f32.xlu0 %v354
    %v356 = vpop.xlane.xlu0 %355
    %v357 = vadd.f32 %v90, %v91
    %358 = vadd.xlane.f32.xlu0 %v357
    %v359 = vpop.xlane.xlu0 %358
    %v360 = vadd.f32 %v92, %v93
    %361 = vadd.xlane.f32.xlu0 %v360
    %v362 = vpop.xlane.xlu0 %361
    %v363 = vadd.f32 %v94, %v95
    %364 = vadd.xlane.f32.xlu0 %v363
    %v365 = vpop.xlane.xlu0 %364
    %v366 = vadd.f32 %v96, %v97
    %367 = vadd.xlane.f32.xlu0 %v366
    %v368 = vpop.xlane.xlu0 %367
    %v369 = vadd.f32 %v98, %v99
    %370 = vadd.xlane.f32.xlu0 %v369
    %v371 = vpop.xlane.xlu0 %370
    %v372 = vadd.f32 %v100, %v101
    %373 = vadd.xlane.f32.xlu0 %v372
    %v374 = vpop.xlane.xlu0 %373
    %v375 = vadd.f32 %v102, %v103
    %376 = vadd.xlane.f32.xlu0 %v375
    %v377 = vpop.xlane.xlu0 %376
    %v378 = vadd.f32 %v104, %v105
    %379 = vadd.xlane.f32.xlu0 %v378
    %v380 = vpop.xlane.xlu0 %379
    %v381 = vadd.f32 %v106, %v107
    %382 = vadd.xlane.f32.xlu0 %v381
    %v383 = vpop.xlane.xlu0 %382
    %v384 = vadd.f32 %v108, %v109
    %385 = vadd.xlane.f32.xlu0 %v384
    %v386 = vpop.xlane.xlu0 %385
    %v387 = vadd.f32 %v110, %v111
    %388 = vadd.xlane.f32.xlu0 %v387
    %v389 = vpop.xlane.xlu0 %388
    %v390 = vadd.f32 %v112, %v113
    %391 = vadd.xlane.f32.xlu0 %v390
    %v392 = vpop.xlane.xlu0 %391
    %v393 = vadd.f32 %v114, %v115
    %394 = vadd.xlane.f32.xlu0 %v393
    %v395 = vpop.xlane.xlu0 %394
    %v396 = vadd.f32 %v116, %v117
    %397 = vadd.xlane.f32.xlu0 %v396
    %v398 = vpop.xlane.xlu0 %397
    %v399 = vadd.f32 %v118, %v119
    %400 = vadd.xlane.f32.xlu0 %v399
    %v401 = vpop.xlane.xlu0 %400
    %v402 = vadd.f32 %v120, %v121
    %403 = vadd.xlane.f32.xlu0 %v402
    %v404 = vpop.xlane.xlu0 %403
    %v405 = vadd.f32 %v122, %v123
    %406 = vadd.xlane.f32.xlu0 %v405
    %v407 = vpop.xlane.xlu0 %406
    %v408 = vadd.f32 %v124, %v125
    %409 = vadd.xlane.f32.xlu0 %v408
    %v410 = vpop.xlane.xlu0 %409
    %v411 = vadd.f32 %v126, %v127
    %412 = vadd.xlane.f32.xlu0 %v411
    %v413 = vpop.xlane.xlu0 %412
    %v414 = vadd.f32 %v128, %v129
    %415 = vadd.xlane.f32.xlu0 %v414
    %v416 = vpop.xlane.xlu0 %415
    %v417 = vadd.f32 %v130, %v131
    %418 = vadd.xlane.f32.xlu0 %v417
    %v419 = vpop.xlane.xlu0 %418
    %v420 = vadd.f32 %v132, %v133
    %421 = vadd.xlane.f32.xlu0 %v420
    %v422 = vpop.xlane.xlu0 %421
    %v423 = vadd.f32 %v134, %v135
    %424 = vadd.xlane.f32.xlu0 %v423
    %v425 = vpop.xlane.xlu0 %424
    %v426 = vadd.f32 %v136, %v137
    %427 = vadd.xlane.f32.xlu0 %v426
    %v428 = vpop.xlane.xlu0 %427
    %v429 = vadd.f32 %v138, %v139
    %430 = vadd.xlane.f32.xlu0 %v429
    %v431 = vpop.xlane.xlu0 %430
    %v432 = vadd.f32 %v140, %v141
    %433 = vadd.xlane.f32.xlu0 %v432
    %v434 = vpop.xlane.xlu0 %433
    %v435 = vadd.f32 %v142, %v143
    %436 = vadd.xlane.f32.xlu0 %v435
    %v437 = vpop.xlane.xlu0 %436
    %v438 = vadd.f32 %v144, %v145
    %439 = vadd.xlane.f32.xlu0 %v438
    %v440 = vpop.xlane.xlu0 %439
    %v441 = vadd.f32 %v146, %v147
    %442 = vadd.xlane.f32.xlu0 %v441
    %v443 = vpop.xlane.xlu0 %442
    %v444 = vadd.f32 %v148, %v149
    %445 = vadd.xlane.f32.xlu0 %v444
    %v446 = vpop.xlane.xlu0 %445
    %v447 = vadd.f32 %v150, %v151
    %448 = vadd.xlane.f32.xlu0 %v447
    %v449 = vpop.xlane.xlu0 %448
    %v450 = vadd.f32 %v152, %v153
    %451 = vadd.xlane.f32.xlu0 %v450
    %v452 = vpop.xlane.xlu0 %451
    %v453 = vadd.f32 %v154, %v155
    %454 = vadd.xlane.f32.xlu0 %v453
    %v455 = vpop.xlane.xlu0 %454
    %v456 = vadd.f32 %v156, %v157
    %457 = vadd.xlane.f32.xlu0 %v456
    %v458 = vpop.xlane.xlu0 %457
    %v459 = vadd.f32 %v158, %v159
    %460 = vadd.xlane.f32.xlu0 %v459
    %v461 = vpop.xlane.xlu0 %460
    %v462 = vadd.f32 %v160, %v161
    %463 = vadd.xlane.f32.xlu0 %v462
    %v464 = vpop.xlane.xlu0 %463
    %v465 = vadd.f32 %v162, %v163
    %466 = vadd.xlane.f32.xlu0 %v465
    %v467 = vpop.xlane.xlu0 %466
    %v468 = vadd.f32 %v164, %v165
    %469 = vadd.xlane.f32.xlu0 %v468
    %v470 = vpop.xlane.xlu0 %469
    %v471 = vadd.f32 %v166, %v167
    %472 = vadd.xlane.f32.xlu0 %v471
    %v473 = vpop.xlane.xlu0 %472
    %v474 = vadd.f32 %v168, %v169
    %475 = vadd.xlane.f32.xlu0 %v474
    %v476 = vpop.xlane.xlu0 %475
    %v477 = vadd.f32 %v170, %v171
    %478 = vadd.xlane.f32.xlu0 %v477
    %v479 = vpop.xlane.xlu0 %478
    %v480 = vadd.f32 %v172, %v173
    %481 = vadd.xlane.f32.xlu0 %v480
    %v482 = vpop.xlane.xlu0 %481
    %v483 = vadd.f32 %v174, %v175
    %484 = vadd.xlane.f32.xlu0 %v483
    %v485 = vpop.xlane.xlu0 %484
    %v486 = vadd.f32 %v176, %v177
    %487 = vadd.xlane.f32.xlu0 %v486
    %v488 = vpop.xlane.xlu0 %487
    %v489 = vadd.f32 %v178, %v179
    %490 = vadd.xlane.f32.xlu0 %v489
    %v491 = vpop.xlane.xlu0 %490
    %v492 = vadd.f32 %v180, %v181
    %493 = vadd.xlane.f32.xlu0 %v492
    %v494 = vpop.xlane.xlu0 %493
    %v495 = vadd.f32 %v182, %v183
    %496 = vadd.xlane.f32.xlu0 %v495
    %v497 = vpop.xlane.xlu0 %496
    %v498 = vadd.f32 %v184, %v185
    %499 = vadd.xlane.f32.xlu0 %v498
    %v500 = vpop.xlane.xlu0 %499
    %v501 = vadd.f32 %v186, %v187
    %502 = vadd.xlane.f32.xlu0 %v501
    %v503 = vpop.xlane.xlu0 %502
    %v504 = vadd.f32 %v188, %v189
    %505 = vadd.xlane.f32.xlu0 %v504
    %v506 = vpop.xlane.xlu0 %505
    %v507 = vadd.f32 %v190, %v191
    %508 = vadd.xlane.f32.xlu0 %v507
    %v509 = vpop.xlane.xlu0 %508
    %v510 = vadd.f32 %v192, %v193
    %511 = vadd.xlane.f32.xlu0 %v510
    %v512 = vpop.xlane.xlu0 %511
    %v513 = vadd.f32 %v194, %v195
    %514 = vadd.xlane.f32.xlu0 %v513
    %v515 = vpop.xlane.xlu0 %514
    %v516 = vadd.f32 %v196, %v197
    %517 = vadd.xlane.f32.xlu0 %v516
    %v518 = vpop.xlane.xlu0 %517
    %v519 = vadd.f32 %v198, %v199
    %520 = vadd.xlane.f32.xlu0 %v519
    %v521 = vpop.xlane.xlu0 %520
    %v522 = vadd.f32 %v200, %v201
    %523 = vadd.xlane.f32.xlu0 %v522
    %v524 = vpop.xlane.xlu0 %523
    %v525 = vadd.f32 %v202, %v203
    %526 = vadd.xlane.f32.xlu0 %v525
    %v527 = vpop.xlane.xlu0 %526
    %v528 = vadd.f32 %v204, %v205
    %529 = vadd.xlane.f32.xlu0 %v528
    %v530 = vpop.xlane.xlu0 %529
    %v531 = vadd.f32 %v206, %v207
    %532 = vadd.xlane.f32.xlu0 %v531
    %v533 = vpop.xlane.xlu0 %532
    %v534 = vadd.f32 %v208, %v209
    %535 = vadd.xlane.f32.xlu0 %v534
    %v536 = vpop.xlane.xlu0 %535
    %v537 = vadd.f32 %v210, %v211
    %538 = vadd.xlane.f32.xlu0 %v537
    %v539 = vpop.xlane.xlu0 %538
    %v540 = vadd.f32 %v212, %v213
    %541 = vadd.xlane.f32.xlu0 %v540
    %v542 = vpop.xlane.xlu0 %541
    %v543 = vadd.f32 %v214, %v215
    %544 = vadd.xlane.f32.xlu0 %v543
    %v545 = vpop.xlane.xlu0 %544
    %v546 = vadd.f32 %v216, %v217
    %547 = vadd.xlane.f32.xlu0 %v546
    %v548 = vpop.xlane.xlu0 %547
    %v549 = vadd.f32 %v218, %v219
    %550 = vadd.xlane.f32.xlu0 %v549
    %v551 = vpop.xlane.xlu0 %550
    %v552 = vadd.f32 %v220, %v221
    %553 = vadd.xlane.f32.xlu0 %v552
    %v554 = vpop.xlane.xlu0 %553
    %v555 = vadd.f32 %v222, %v223
    %556 = vadd.xlane.f32.xlu0 %v555
    %v557 = vpop.xlane.xlu0 %556
    %v558 = vadd.f32 %v224, %v225
    %559 = vadd.xlane.f32.xlu0 %v558
    %v560 = vpop.xlane.xlu0 %559
    %v561 = vadd.f32 %v226, %v227
    %562 = vadd.xlane.f32.xlu0 %v561
    %v563 = vpop.xlane.xlu0 %562
    %v564 = vadd.f32 %v228, %v229
    %565 = vadd.xlane.f32.xlu0 %v564
    %v566 = vpop.xlane.xlu0 %565
    %v567 = vadd.f32 %v230, %v231
    %568 = vadd.xlane.f32.xlu0 %v567
    %v569 = vpop.xlane.xlu0 %568
    %v570 = vadd.f32 %v232, %v233
    %571 = vadd.xlane.f32.xlu0 %v570
    %v572 = vpop.xlane.xlu0 %571
    %v573 = vadd.f32 %v234, %v235
    %574 = vadd.xlane.f32.xlu0 %v573
    %v575 = vpop.xlane.xlu0 %574
    %v576 = vadd.f32 %v236, %v237
    %577 = vadd.xlane.f32.xlu0 %v576
    %v578 = vpop.xlane.xlu0 %577
    %v579 = vadd.f32 %v238, %v239
    %580 = vadd.xlane.f32.xlu0 %v579
    %v581 = vpop.xlane.xlu0 %580
    %v582 = vadd.f32 %v240, %v241
    %583 = vadd.xlane.f32.xlu0 %v582
    %v584 = vpop.xlane.xlu0 %583
    %v585 = vadd.f32 %v242, %v243
    %586 = vadd.xlane.f32.xlu0 %v585
    %v587 = vpop.xlane.xlu0 %586
    %v588 = vadd.f32 %v244, %v245
    %589 = vadd.xlane.f32.xlu0 %v588
    %v590 = vpop.xlane.xlu0 %589
    %v591 = vadd.f32 %v246, %v247
    %592 = vadd.xlane.f32.xlu0 %v591
    %v593 = vpop.xlane.xlu0 %592
    %v594 = vadd.f32 %v248, %v249
    %595 = vadd.xlane.f32.xlu0 %v594
    %v596 = vpop.xlane.xlu0 %595
    %v597 = vadd.f32 %v250, %v251
    %598 = vadd.xlane.f32.xlu0 %v597
    %v599 = vpop.xlane.xlu0 %598
    %v600 = vadd.f32 %v252, %v253
    %601 = vadd.xlane.f32.xlu0 %v600
    %v602 = vpop.xlane.xlu0 %601
    %v603 = vadd.f32 %v254, %v255
    %604 = vadd.xlane.f32.xlu0 %v603
    %v605 = vpop.xlane.xlu0 %604
    %v606 = vadd.f32 %v256, %v257
    %607 = vadd.xlane.f32.xlu0 %v606
    %v608 = vpop.xlane.xlu0 %607
    %v609 = vadd.f32 %v258, %v259
    %610 = vadd.xlane.f32.xlu0 %v609
    %v611 = vpop.xlane.xlu0 %610
    %v612 = vadd.f32 %v260, %v261
    %613 = vadd.xlane.f32.xlu0 %v612
    %v614 = vpop.xlane.xlu0 %613
    %v615 = vadd.f32 %v262, %v263
    %616 = vadd.xlane.f32.xlu0 %v615
    %v617 = vpop.xlane.xlu0 %616
    %v618 = vadd.f32 %v264, %v265
    %619 = vadd.xlane.f32.xlu0 %v618
    %v620 = vpop.xlane.xlu0 %619
    %v621 = vadd.f32 %v266, %v267
    %622 = vadd.xlane.f32.xlu0 %v621
    %v623 = vpop.xlane.xlu0 %622
    %v624 = vadd.f32 %v268, %v269
    %625 = vadd.xlane.f32.xlu0 %v624
    %v626 = vpop.xlane.xlu0 %625
    %v627 = vadd.f32 %v270, %v271
    %628 = vadd.xlane.f32.xlu0 %v627
    %v629 = vpop.xlane.xlu0 %628
    %v630 = vadd.f32 %v272, %v273
    %631 = vadd.xlane.f32.xlu0 %v630
    %v632 = vpop.xlane.xlu0 %631
    %v633 = vadd.f32 %v274, %v275
    %634 = vadd.xlane.f32.xlu0 %v633
    %v635 = vpop.xlane.xlu0 %634
    %v636 = vadd.f32 %v276, %v277
    %637 = vadd.xlane.f32.xlu0 %v636
    %v638 = vpop.xlane.xlu0 %637
    %v639 = vadd.f32 %v278, %v279
    %640 = vadd.xlane.f32.xlu0 %v639
    %v641 = vpop.xlane.xlu0 %640
    %v642 = vadd.f32 %v280, %v281
    %643 = vadd.xlane.f32.xlu0 %v642
    %v644 = vpop.xlane.xlu0 %643
    %v645 = vadd.f32 %v282, %v283
    %646 = vadd.xlane.f32.xlu0 %v645
    %v647 = vpop.xlane.xlu0 %646
    %v648 = vadd.f32 %v284, %v285
    %649 = vadd.xlane.f32.xlu0 %v648
    %v650 = vpop.xlane.xlu0 %649
    %v651 = vadd.f32 %v286, %v287
    %652 = vadd.xlane.f32.xlu0 %v651
    %v653 = vpop.xlane.xlu0 %652
    %v654 = vadd.f32 %v288, %v289
    %655 = vadd.xlane.f32.xlu0 %v654
    %v656 = vpop.xlane.xlu0 %655
    %v657 = vadd.f32 %v290, %v291
    %658 = vadd.xlane.f32.xlu0 %v657
    %v659 = vpop.xlane.xlu0 %658
    %v660 = vadd.f32 %v292, %v293
    %661 = vadd.xlane.f32.xlu0 %v660
    %v662 = vpop.xlane.xlu0 %661
    %v663 = vadd.f32 %v294, %v295
    %664 = vadd.xlane.f32.xlu0 %v663
    %v665 = vpop.xlane.xlu0 %664
    %v666 = vadd.f32 %v296, %v297
    %667 = vadd.xlane.f32.xlu0 %v666
    %v668 = vpop.xlane.xlu0 %667
    %v669 = vadd.f32 %v298, %v299
    %670 = vadd.xlane.f32.xlu0 %v669
    %v671 = vpop.xlane.xlu0 %670
    %v672 = vadd.f32 %v300, %v301
    %673 = vadd.xlane.f32.xlu0 %v672
    %v674 = vpop.xlane.xlu0 %673
    %v675 = vadd.f32 %v302, %v303
    %676 = vadd.xlane.f32.xlu0 %v675
    %v677 = vpop.xlane.xlu0 %676
    %v678 = vadd.f32 %v304, %v305
    %679 = vadd.xlane.f32.xlu0 %v678
    %v680 = vpop.xlane.xlu0 %679
    %v681 = vadd.f32 %v306, %v307
    %682 = vadd.xlane.f32.xlu0 %v681
    %v683 = vpop.xlane.xlu0 %682
    %v684 = vadd.f32 %v308, %v309
    %685 = vadd.xlane.f32.xlu0 %v684
    %v686 = vpop.xlane.xlu0 %685
    %v687 = vadd.f32 %v310, %v311
    %688 = vadd.xlane.f32.xlu0 %v687
    %v689 = vpop.xlane.xlu0 %688
    %v690 = vadd.f32 %v312, %v313
    %691 = vadd.xlane.f32.xlu0 %v690
    %v692 = vpop.xlane.xlu0 %691
    %v693 = vadd.f32 %v314, %v315
    %694 = vadd.xlane.f32.xlu0 %v693
    %v695 = vpop.xlane.xlu0 %694
    %v696 = vadd.f32 %v316, %v317
    %697 = vadd.xlane.f32.xlu0 %v696
    %v698 = vpop.xlane.xlu0 %697
    %v699 = vadd.f32 %v318, %v319
    %700 = vadd.xlane.f32.xlu0 %v699
    %v701 = vpop.xlane.xlu0 %700
    %v702 = vadd.f32 %v320, %v321
    %703 = vadd.xlane.f32.xlu0 %v702
    %v704 = vpop.xlane.xlu0 %703
    %v705 = vadd.f32 %v322, %v323
    %706 = vadd.xlane.f32.xlu0 %v705
    %v707 = vpop.xlane.xlu0 %706
    %v708 = vmul.f32 %v326, 0.00390625
    %v709 = vmul.f32 %v329, 0.00390625
    %v710 = vmul.f32 %v332, 0.00390625
    %v711 = vmul.f32 %v335, 0.00390625
    %v712 = vmul.f32 %v338, 0.00390625
    %v713 = vmul.f32 %v341, 0.00390625
    %v714 = vmul.f32 %v344, 0.00390625
    %v715 = vmul.f32 %v347, 0.00390625
    %v716 = vmul.f32 %v350, 0.00390625
    %v717 = vmul.f32 %v353, 0.00390625
    %v718 = vmul.f32 %v356, 0.00390625
    %v719 = vmul.f32 %v359, 0.00390625
    %v720 = vmul.f32 %v362, 0.00390625
    %v721 = vmul.f32 %v365, 0.00390625
    %v722 = vmul.f32 %v368, 0.00390625
    %v723 = vmul.f32 %v371, 0.00390625
    %v724 = vmul.f32 %v374, 0.00390625
    %v725 = vmul.f32 %v377, 0.00390625
    %v726 = vmul.f32 %v380, 0.00390625
    %v727 = vmul.f32 %v383, 0.00390625
    %v728 = vmul.f32 %v386, 0.00390625
    %v729 = vmul.f32 %v389, 0.00390625
    %v730 = vmul.f32 %v392, 0.00390625
    %v731 = vmul.f32 %v395, 0.00390625
    %v732 = vmul.f32 %v398, 0.00390625
    %v733 = vmul.f32 %v401, 0.00390625
    %v734 = vmul.f32 %v404, 0.00390625
    %v735 = vmul.f32 %v407, 0.00390625
    %v736 = vmul.f32 %v410, 0.00390625
    %v737 = vmul.f32 %v413, 0.00390625
    %v738 = vmul.f32 %v416, 0.00390625
    %v739 = vmul.f32 %v419, 0.00390625
    %v740 = vmul.f32 %v422, 0.00390625
    %v741 = vmul.f32 %v425, 0.00390625
    %v742 = vmul.f32 %v428, 0.00390625
    %v743 = vmul.f32 %v431, 0.00390625
    %v744 = vmul.f32 %v434, 0.00390625
    %v745 = vmul.f32 %v437, 0.00390625
    %v746 = vmul.f32 %v440, 0.00390625
    %v747 = vmul.f32 %v443, 0.00390625
    %v748 = vmul.f32 %v446, 0.00390625
    %v749 = vmul.f32 %v449, 0.00390625
    %v750 = vmul.f32 %v452, 0.00390625
    %v751 = vmul.f32 %v455, 0.00390625
    %v752 = vmul.f32 %v458, 0.00390625
    %v753 = vmul.f32 %v461, 0.00390625
    %v754 = vmul.f32 %v464, 0.00390625
    %v755 = vmul.f32 %v467, 0.00390625
    %v756 = vmul.f32 %v470, 0.00390625
    %v757 = vmul.f32 %v473, 0.00390625
    %v758 = vmul.f32 %v476, 0.00390625
    %v759 = vmul.f32 %v479, 0.00390625
    %v760 = vmul.f32 %v482, 0.00390625
    %v761 = vmul.f32 %v485, 0.00390625
    %v762 = vmul.f32 %v488, 0.00390625
    %v763 = vmul.f32 %v491, 0.00390625
    %v764 = vmul.f32 %v494, 0.00390625
    %v765 = vmul.f32 %v497, 0.00390625
    %v766 = vmul.f32 %v500, 0.00390625
    %v767 = vmul.f32 %v503, 0.00390625
    %v768 = vmul.f32 %v506, 0.00390625
    %v769 = vmul.f32 %v509, 0.00390625
    %v770 = vmul.f32 %v512, 0.00390625
    %v771 = vmul.f32 %v515, 0.00390625
    %v772 = vmul.f32 %v518, 0.00390625
    %v773 = vmul.f32 %v521, 0.00390625
    %v774 = vmul.f32 %v524, 0.00390625
    %v775 = vmul.f32 %v527, 0.00390625
    %v776 = vmul.f32 %v530, 0.00390625
    %v777 = vmul.f32 %v533, 0.00390625
    %v778 = vmul.f32 %v536, 0.00390625
    %v779 = vmul.f32 %v539, 0.00390625
    %v780 = vmul.f32 %v542, 0.00390625
    %v781 = vmul.f32 %v545, 0.00390625
    %v782 = vmul.f32 %v548, 0.00390625
    %v783 = vmul.f32 %v551, 0.00390625
    %v784 = vmul.f32 %v554, 0.00390625
    %v785 = vmul.f32 %v557, 0.00390625
    %v786 = vmul.f32 %v560, 0.00390625
    %v787 = vmul.f32 %v563, 0.00390625
    %v788 = vmul.f32 %v566, 0.00390625
    %v789 = vmul.f32 %v569, 0.00390625
    %v790 = vmul.f32 %v572, 0.00390625
    %v791 = vmul.f32 %v575, 0.00390625
    %v792 = vmul.f32 %v578, 0.00390625
    %v793 = vmul.f32 %v581, 0.00390625
    %v794 = vmul.f32 %v584, 0.00390625
    %v795 = vmul.f32 %v587, 0.00390625
    %v796 = vmul.f32 %v590, 0.00390625
    %v797 = vmul.f32 %v593, 0.00390625
    %v798 = vmul.f32 %v596, 0.00390625
    %v799 = vmul.f32 %v599, 0.00390625
    %v800 = vmul.f32 %v602, 0.00390625
    %v801 = vmul.f32 %v605, 0.00390625
    %v802 = vmul.f32 %v608, 0.00390625
    %v803 = vmul.f32 %v611, 0.00390625
    %v804 = vmul.f32 %v614, 0.00390625
    %v805 = vmul.f32 %v617, 0.00390625
    %v806 = vmul.f32 %v620, 0.00390625
    %v807 = vmul.f32 %v623, 0.00390625
    %v808 = vmul.f32 %v626, 0.00390625
    %v809 = vmul.f32 %v629, 0.00390625
    %v810 = vmul.f32 %v632, 0.00390625
    %v811 = vmul.f32 %v635, 0.00390625
    %v812 = vmul.f32 %v638, 0.00390625
    %v813 = vmul.f32 %v641, 0.00390625
    %v814 = vmul.f32 %v644, 0.00390625
    %v815 = vmul.f32 %v647, 0.00390625
    %v816 = vmul.f32 %v650, 0.00390625
    %v817 = vmul.f32 %v653, 0.00390625
    %v818 = vmul.f32 %v656, 0.00390625
    %v819 = vmul.f32 %v659, 0.00390625
    %v820 = vmul.f32 %v662, 0.00390625
    %v821 = vmul.f32 %v665, 0.00390625
    %v822 = vmul.f32 %v668, 0.00390625
    %v823 = vmul.f32 %v671, 0.00390625
    %v824 = vmul.f32 %v674, 0.00390625
    %v825 = vmul.f32 %v677, 0.00390625
    %v826 = vmul.f32 %v680, 0.00390625
    %v827 = vmul.f32 %v683, 0.00390625
    %v828 = vmul.f32 %v686, 0.00390625
    %v829 = vmul.f32 %v689, 0.00390625
    %v830 = vmul.f32 %v692, 0.00390625
    %v831 = vmul.f32 %v695, 0.00390625
    %v832 = vmul.f32 %v698, 0.00390625
    %v833 = vmul.f32 %v701, 0.00390625
    %v834 = vmul.f32 %v704, 0.00390625
    %v835 = vmul.f32 %v707, 0.00390625
    %v836 = vmax.f32 %v68, %v69
    %837 = vmax.xlane.f32.xlu0 %v836
    %v838 = vpop.xlane.xlu0 %837
    %v839 = vmax.f32 %v70, %v71
    %840 = vmax.xlane.f32.xlu0 %v839
    %v841 = vpop.xlane.xlu0 %840
    %v842 = vmax.f32 %v72, %v73
    %843 = vmax.xlane.f32.xlu0 %v842
    %v844 = vpop.xlane.xlu0 %843
    %v845 = vmax.f32 %v74, %v75
    %846 = vmax.xlane.f32.xlu0 %v845
    %v847 = vpop.xlane.xlu0 %846
    %v848 = vmax.f32 %v76, %v77
    %849 = vmax.xlane.f32.xlu0 %v848
    %v850 = vpop.xlane.xlu0 %849
    %v851 = vmax.f32 %v78, %v79
    %852 = vmax.xlane.f32.xlu0 %v851
    %v853 = vpop.xlane.xlu0 %852
    %v854 = vmax.f32 %v80, %v81
    %855 = vmax.xlane.f32.xlu0 %v854
    %v856 = vpop.xlane.xlu0 %855
    %v857 = vmax.f32 %v82, %v83
    %858 = vmax.xlane.f32.xlu0 %v857
    %v859 = vpop.xlane.xlu0 %858
    %v860 = vmax.f32 %v84, %v85
    %861 = vmax.xlane.f32.xlu0 %v860
    %v862 = vpop.xlane.xlu0 %861
    %v863 = vmax.f32 %v86, %v87
    %864 = vmax.xlane.f32.xlu0 %v863
    %v865 = vpop.xlane.xlu0 %864
    %v866 = vmax.f32 %v88, %v89
    %867 = vmax.xlane.f32.xlu0 %v866
    %v868 = vpop.xlane.xlu0 %867
    %v869 = vmax.f32 %v90, %v91
    %870 = vmax.xlane.f32.xlu0 %v869
    %v871 = vpop.xlane.xlu0 %870
    %v872 = vmax.f32 %v92, %v93
    %873 = vmax.xlane.f32.xlu0 %v872
    %v874 = vpop.xlane.xlu0 %873
    %v875 = vmax.f32 %v94, %v95
    %876 = vmax.xlane.f32.xlu0 %v875
    %v877 = vpop.xlane.xlu0 %876
    %v878 = vmax.f32 %v96, %v97
    %879 = vmax.xlane.f32.xlu0 %v878
    %v880 = vpop.xlane.xlu0 %879
    %v881 = vmax.f32 %v98, %v99
    %882 = vmax.xlane.f32.xlu0 %v881
    %v883 = vpop.xlane.xlu0 %882
    %v884 = vmax.f32 %v100, %v101
    %885 = vmax.xlane.f32.xlu0 %v884
    %v886 = vpop.xlane.xlu0 %885
    %v887 = vmax.f32 %v102, %v103
    %888 = vmax.xlane.f32.xlu0 %v887
    %v889 = vpop.xlane.xlu0 %888
    %v890 = vmax.f32 %v104, %v105
    %891 = vmax.xlane.f32.xlu0 %v890
    %v892 = vpop.xlane.xlu0 %891
    %v893 = vmax.f32 %v106, %v107
    %894 = vmax.xlane.f32.xlu0 %v893
    %v895 = vpop.xlane.xlu0 %894
    %v896 = vmax.f32 %v108, %v109
    %897 = vmax.xlane.f32.xlu0 %v896
    %v898 = vpop.xlane.xlu0 %897
    %v899 = vmax.f32 %v110, %v111
    %900 = vmax.xlane.f32.xlu0 %v899
    %v901 = vpop.xlane.xlu0 %900
    %v902 = vmax.f32 %v112, %v113
    %903 = vmax.xlane.f32.xlu0 %v902
    %v904 = vpop.xlane.xlu0 %903
    %v905 = vmax.f32 %v114, %v115
    %906 = vmax.xlane.f32.xlu0 %v905
    %v907 = vpop.xlane.xlu0 %906
    %v908 = vmax.f32 %v116, %v117
    %909 = vmax.xlane.f32.xlu0 %v908
    %v910 = vpop.xlane.xlu0 %909
    %v911 = vmax.f32 %v118, %v119
    %912 = vmax.xlane.f32.xlu0 %v911
    %v913 = vpop.xlane.xlu0 %912
    %v914 = vmax.f32 %v120, %v121
    %915 = vmax.xlane.f32.xlu0 %v914
    %v916 = vpop.xlane.xlu0 %915
    %v917 = vmax.f32 %v122, %v123
    %918 = vmax.xlane.f32.xlu0 %v917
    %v919 = vpop.xlane.xlu0 %918
    %v920 = vmax.f32 %v124, %v125
    %921 = vmax.xlane.f32.xlu0 %v920
    %v922 = vpop.xlane.xlu0 %921
    %v923 = vmax.f32 %v126, %v127
    %924 = vmax.xlane.f32.xlu0 %v923
    %v925 = vpop.xlane.xlu0 %924
    %v926 = vmax.f32 %v128, %v129
    %927 = vmax.xlane.f32.xlu0 %v926
    %v928 = vpop.xlane.xlu0 %927
    %v929 = vmax.f32 %v130, %v131
    %930 = vmax.xlane.f32.xlu0 %v929
    %v931 = vpop.xlane.xlu0 %930
    %v932 = vmax.f32 %v132, %v133
    %933 = vmax.xlane.f32.xlu0 %v932
    %v934 = vpop.xlane.xlu0 %933
    %v935 = vmax.f32 %v134, %v135
    %936 = vmax.xlane.f32.xlu0 %v935
    %v937 = vpop.xlane.xlu0 %936
    %v938 = vmax.f32 %v136, %v137
    %939 = vmax.xlane.f32.xlu0 %v938
    %v940 = vpop.xlane.xlu0 %939
    %v941 = vmax.f32 %v138, %v139
    %942 = vmax.xlane.f32.xlu0 %v941
    %v943 = vpop.xlane.xlu0 %942
    %v944 = vmax.f32 %v140, %v141
    %945 = vmax.xlane.f32.xlu0 %v944
    %v946 = vpop.xlane.xlu0 %945
    %v947 = vmax.f32 %v142, %v143
    %948 = vmax.xlane.f32.xlu0 %v947
    %v949 = vpop.xlane.xlu0 %948
    %v950 = vmax.f32 %v144, %v145
    %951 = vmax.xlane.f32.xlu0 %v950
    %v952 = vpop.xlane.xlu0 %951
    %v953 = vmax.f32 %v146, %v147
    %954 = vmax.xlane.f32.xlu0 %v953
    %v955 = vpop.xlane.xlu0 %954
    %v956 = vmax.f32 %v148, %v149
    %957 = vmax.xlane.f32.xlu0 %v956
    %v958 = vpop.xlane.xlu0 %957
    %v959 = vmax.f32 %v150, %v151
    %960 = vmax.xlane.f32.xlu0 %v959
    %v961 = vpop.xlane.xlu0 %960
    %v962 = vmax.f32 %v152, %v153
    %963 = vmax.xlane.f32.xlu0 %v962
    %v964 = vpop.xlane.xlu0 %963
    %v965 = vmax.f32 %v154, %v155
    %966 = vmax.xlane.f32.xlu0 %v965
    %v967 = vpop.xlane.xlu0 %966
    %v968 = vmax.f32 %v156, %v157
    %969 = vmax.xlane.f32.xlu0 %v968
    %v970 = vpop.xlane.xlu0 %969
    %v971 = vmax.f32 %v158, %v159
    %972 = vmax.xlane.f32.xlu0 %v971
    %v973 = vpop.xlane.xlu0 %972
    %v974 = vmax.f32 %v160, %v161
    %975 = vmax.xlane.f32.xlu0 %v974
    %v976 = vpop.xlane.xlu0 %975
    %v977 = vmax.f32 %v162, %v163
    %978 = vmax.xlane.f32.xlu0 %v977
    %v979 = vpop.xlane.xlu0 %978
    %v980 = vmax.f32 %v164, %v165
    %981 = vmax.xlane.f32.xlu0 %v980
    %v982 = vpop.xlane.xlu0 %981
    %v983 = vmax.f32 %v166, %v167
    %984 = vmax.xlane.f32.xlu0 %v983
    %v985 = vpop.xlane.xlu0 %984
    %v986 = vmax.f32 %v168, %v169
    %987 = vmax.xlane.f32.xlu0 %v986
    %v988 = vpop.xlane.xlu0 %987
    %v989 = vmax.f32 %v170, %v171
    %990 = vmax.xlane.f32.xlu0 %v989
    %v991 = vpop.xlane.xlu0 %990
    %v992 = vmax.f32 %v172, %v173
    %993 = vmax.xlane.f32.xlu0 %v992
    %v994 = vpop.xlane.xlu0 %993
    %v995 = vmax.f32 %v174, %v175
    %996 = vmax.xlane.f32.xlu0 %v995
    %v997 = vpop.xlane.xlu0 %996
    %v998 = vmax.f32 %v176, %v177
    %999 = vmax.xlane.f32.xlu0 %v998
    %v1000 = vpop.xlane.xlu0 %999
    %v1001 = vmax.f32 %v178, %v179
    %1002 = vmax.xlane.f32.xlu0 %v1001
    %v1003 = vpop.xlane.xlu0 %1002
    %v1004 = vmax.f32 %v180, %v181
    %1005 = vmax.xlane.f32.xlu0 %v1004
    %v1006 = vpop.xlane.xlu0 %1005
    %v1007 = vmax.f32 %v182, %v183
    %1008 = vmax.xlane.f32.xlu0 %v1007
    %v1009 = vpop.xlane.xlu0 %1008
    %v1010 = vmax.f32 %v184, %v185
    %1011 = vmax.xlane.f32.xlu0 %v1010
    %v1012 = vpop.xlane.xlu0 %1011
    %v1013 = vmax.f32 %v186, %v187
    %1014 = vmax.xlane.f32.xlu0 %v1013
    %v1015 = vpop.xlane.xlu0 %1014
    %v1016 = vmax.f32 %v188, %v189
    %1017 = vmax.xlane.f32.xlu0 %v1016
    %v1018 = vpop.xlane.xlu0 %1017
    %v1019 = vmax.f32 %v190, %v191
    %1020 = vmax.xlane.f32.xlu0 %v1019
    %v1021 = vpop.xlane.xlu0 %1020
    %v1022 = vmax.f32 %v192, %v193
    %1023 = vmax.xlane.f32.xlu0 %v1022
    %v1024 = vpop.xlane.xlu0 %1023
    %v1025 = vmax.f32 %v194, %v195
    %1026 = vmax.xlane.f32.xlu0 %v1025
    %v1027 = vpop.xlane.xlu0 %1026
    %v1028 = vmax.f32 %v196, %v197
    %1029 = vmax.xlane.f32.xlu0 %v1028
    %v1030 = vpop.xlane.xlu0 %1029
    %v1031 = vmax.f32 %v198, %v199
    %1032 = vmax.xlane.f32.xlu0 %v1031
    %v1033 = vpop.xlane.xlu0 %1032
    %v1034 = vmax.f32 %v200, %v201
    %1035 = vmax.xlane.f32.xlu0 %v1034
    %v1036 = vpop.xlane.xlu0 %1035
    %v1037 = vmax.f32 %v202, %v203
    %1038 = vmax.xlane.f32.xlu0 %v1037
    %v1039 = vpop.xlane.xlu0 %1038
    %v1040 = vmax.f32 %v204, %v205
    %1041 = vmax.xlane.f32.xlu0 %v1040
    %v1042 = vpop.xlane.xlu0 %1041
    %v1043 = vmax.f32 %v206, %v207
    %1044 = vmax.xlane.f32.xlu0 %v1043
    %v1045 = vpop.xlane.xlu0 %1044
    %v1046 = vmax.f32 %v208, %v209
    %1047 = vmax.xlane.f32.xlu0 %v1046
    %v1048 = vpop.xlane.xlu0 %1047
    %v1049 = vmax.f32 %v210, %v211
    %1050 = vmax.xlane.f32.xlu0 %v1049
    %v1051 = vpop.xlane.xlu0 %1050
    %v1052 = vmax.f32 %v212, %v213
    %1053 = vmax.xlane.f32.xlu0 %v1052
    %v1054 = vpop.xlane.xlu0 %1053
    %v1055 = vmax.f32 %v214, %v215
    %1056 = vmax.xlane.f32.xlu0 %v1055
    %v1057 = vpop.xlane.xlu0 %1056
    %v1058 = vmax.f32 %v216, %v217
    %1059 = vmax.xlane.f32.xlu0 %v1058
    %v1060 = vpop.xlane.xlu0 %1059
    %v1061 = vmax.f32 %v218, %v219
    %1062 = vmax.xlane.f32.xlu0 %v1061
    %v1063 = vpop.xlane.xlu0 %1062
    %v1064 = vmax.f32 %v220, %v221
    %1065 = vmax.xlane.f32.xlu0 %v1064
    %v1066 = vpop.xlane.xlu0 %1065
    %v1067 = vmax.f32 %v222, %v223
    %1068 = vmax.xlane.f32.xlu0 %v1067
    %v1069 = vpop.xlane.xlu0 %1068
    %v1070 = vmax.f32 %v224, %v225
    %1071 = vmax.xlane.f32.xlu0 %v1070
    %v1072 = vpop.xlane.xlu0 %1071
    %v1073 = vmax.f32 %v226, %v227
    %1074 = vmax.xlane.f32.xlu0 %v1073
    %v1075 = vpop.xlane.xlu0 %1074
    %v1076 = vmax.f32 %v228, %v229
    %1077 = vmax.xlane.f32.xlu0 %v1076
    %v1078 = vpop.xlane.xlu0 %1077
    %v1079 = vmax.f32 %v230, %v231
    %1080 = vmax.xlane.f32.xlu0 %v1079
    %v1081 = vpop.xlane.xlu0 %1080
    %v1082 = vmax.f32 %v232, %v233
    %1083 = vmax.xlane.f32.xlu0 %v1082
    %v1084 = vpop.xlane.xlu0 %1083
    %v1085 = vmax.f32 %v234, %v235
    %1086 = vmax.xlane.f32.xlu0 %v1085
    %v1087 = vpop.xlane.xlu0 %1086
    %v1088 = vmax.f32 %v236, %v237
    %1089 = vmax.xlane.f32.xlu0 %v1088
    %v1090 = vpop.xlane.xlu0 %1089
    %v1091 = vmax.f32 %v238, %v239
    %1092 = vmax.xlane.f32.xlu0 %v1091
    %v1093 = vpop.xlane.xlu0 %1092
    %v1094 = vmax.f32 %v240, %v241
    %1095 = vmax.xlane.f32.xlu0 %v1094
    %v1096 = vpop.xlane.xlu0 %1095
    %v1097 = vmax.f32 %v242, %v243
    %1098 = vmax.xlane.f32.xlu0 %v1097
    %v1099 = vpop.xlane.xlu0 %1098
    %v1100 = vmax.f32 %v244, %v245
    %1101 = vmax.xlane.f32.xlu0 %v1100
    %v1102 = vpop.xlane.xlu0 %1101
    %v1103 = vmax.f32 %v246, %v247
    %1104 = vmax.xlane.f32.xlu0 %v1103
    %v1105 = vpop.xlane.xlu0 %1104
    %v1106 = vmax.f32 %v248, %v249
    %1107 = vmax.xlane.f32.xlu0 %v1106
    %v1108 = vpop.xlane.xlu0 %1107
    %v1109 = vmax.f32 %v250, %v251
    %1110 = vmax.xlane.f32.xlu0 %v1109
    %v1111 = vpop.xlane.xlu0 %1110
    %v1112 = vmax.f32 %v252, %v253
    %1113 = vmax.xlane.f32.xlu0 %v1112
    %v1114 = vpop.xlane.xlu0 %1113
    %v1115 = vmax.f32 %v254, %v255
    %1116 = vmax.xlane.f32.xlu0 %v1115
    %v1117 = vpop.xlane.xlu0 %1116
    %v1118 = vmax.f32 %v256, %v257
    %1119 = vmax.xlane.f32.xlu0 %v1118
    %v1120 = vpop.xlane.xlu0 %1119
    %v1121 = vmax.f32 %v258, %v259
    %1122 = vmax.xlane.f32.xlu0 %v1121
    %v1123 = vpop.xlane.xlu0 %1122
    %v1124 = vmax.f32 %v260, %v261
    %1125 = vmax.xlane.f32.xlu0 %v1124
    %v1126 = vpop.xlane.xlu0 %1125
    %v1127 = vmax.f32 %v262, %v263
    %1128 = vmax.xlane.f32.xlu0 %v1127
    %v1129 = vpop.xlane.xlu0 %1128
    %v1130 = vmax.f32 %v264, %v265
    %1131 = vmax.xlane.f32.xlu0 %v1130
    %v1132 = vpop.xlane.xlu0 %1131
    %v1133 = vmax.f32 %v266, %v267
    %1134 = vmax.xlane.f32.xlu0 %v1133
    %v1135 = vpop.xlane.xlu0 %1134
    %v1136 = vmax.f32 %v268, %v269
    %1137 = vmax.xlane.f32.xlu0 %v1136
    %v1138 = vpop.xlane.xlu0 %1137
    %v1139 = vmax.f32 %v270, %v271
    %1140 = vmax.xlane.f32.xlu0 %v1139
    %v1141 = vpop.xlane.xlu0 %1140
    %v1142 = vmax.f32 %v272, %v273
    %1143 = vmax.xlane.f32.xlu0 %v1142
    %v1144 = vpop.xlane.xlu0 %1143
    %v1145 = vmax.f32 %v274, %v275
    %1146 = vmax.xlane.f32.xlu0 %v1145
    %v1147 = vpop.xlane.xlu0 %1146
    %v1148 = vmax.f32 %v276, %v277
    %1149 = vmax.xlane.f32.xlu0 %v1148
    %v1150 = vpop.xlane.xlu0 %1149
    %v1151 = vmax.f32 %v278, %v279
    %1152 = vmax.xlane.f32.xlu0 %v1151
    %v1153 = vpop.xlane.xlu0 %1152
    %v1154 = vmax.f32 %v280, %v281
    %1155 = vmax.xlane.f32.xlu0 %v1154
    %v1156 = vpop.xlane.xlu0 %1155
    %v1157 = vmax.f32 %v282, %v283
    %1158 = vmax.xlane.f32.xlu0 %v1157
    %v1159 = vpop.xlane.xlu0 %1158
    %v1160 = vmax.f32 %v284, %v285
    %1161 = vmax.xlane.f32.xlu0 %v1160
    %v1162 = vpop.xlane.xlu0 %1161
    %v1163 = vmax.f32 %v286, %v287
    %1164 = vmax.xlane.f32.xlu0 %v1163
    %v1165 = vpop.xlane.xlu0 %1164
    %v1166 = vmax.f32 %v288, %v289
    %1167 = vmax.xlane.f32.xlu0 %v1166
    %v1168 = vpop.xlane.xlu0 %1167
    %v1169 = vmax.f32 %v290, %v291
    %1170 = vmax.xlane.f32.xlu0 %v1169
    %v1171 = vpop.xlane.xlu0 %1170
    %v1172 = vmax.f32 %v292, %v293
    %1173 = vmax.xlane.f32.xlu0 %v1172
    %v1174 = vpop.xlane.xlu0 %1173
    %v1175 = vmax.f32 %v294, %v295
    %1176 = vmax.xlane.f32.xlu0 %v1175
    %v1177 = vpop.xlane.xlu0 %1176
    %v1178 = vmax.f32 %v296, %v297
    %1179 = vmax.xlane.f32.xlu0 %v1178
    %v1180 = vpop.xlane.xlu0 %1179
    %v1181 = vmax.f32 %v298, %v299
    %1182 = vmax.xlane.f32.xlu0 %v1181
    %v1183 = vpop.xlane.xlu0 %1182
    %v1184 = vmax.f32 %v300, %v301
    %1185 = vmax.xlane.f32.xlu0 %v1184
    %v1186 = vpop.xlane.xlu0 %1185
    %v1187 = vmax.f32 %v302, %v303
    %1188 = vmax.xlane.f32.xlu0 %v1187
    %v1189 = vpop.xlane.xlu0 %1188
    %v1190 = vmax.f32 %v304, %v305
    %1191 = vmax.xlane.f32.xlu0 %v1190
    %v1192 = vpop.xlane.xlu0 %1191
    %v1193 = vmax.f32 %v306, %v307
    %1194 = vmax.xlane.f32.xlu0 %v1193
    %v1195 = vpop.xlane.xlu0 %1194
    %v1196 = vmax.f32 %v308, %v309
    %1197 = vmax.xlane.f32.xlu0 %v1196
    %v1198 = vpop.xlane.xlu0 %1197
    %v1199 = vmax.f32 %v310, %v311
    %1200 = vmax.xlane.f32.xlu0 %v1199
    %v1201 = vpop.xlane.xlu0 %1200
    %v1202 = vmax.f32 %v312, %v313
    %1203 = vmax.xlane.f32.xlu0 %v1202
    %v1204 = vpop.xlane.xlu0 %1203
    %v1205 = vmax.f32 %v314, %v315
    %1206 = vmax.xlane.f32.xlu0 %v1205
    %v1207 = vpop.xlane.xlu0 %1206
    %v1208 = vmax.f32 %v316, %v317
    %1209 = vmax.xlane.f32.xlu0 %v1208
    %v1210 = vpop.xlane.xlu0 %1209
    %v1211 = vmax.f32 %v318, %v319
    %1212 = vmax.xlane.f32.xlu0 %v1211
    %v1213 = vpop.xlane.xlu0 %1212
    %v1214 = vmax.f32 %v320, %v321
    %1215 = vmax.xlane.f32.xlu0 %v1214
    %v1216 = vpop.xlane.xlu0 %1215
    %v1217 = vmax.f32 %v322, %v323
    %1218 = vmax.xlane.f32.xlu0 %v1217
    %v1219 = vpop.xlane.xlu0 %1218
    %v1348 = vlaneseq
    %v1349 = vand.u32 %v1348, 127
    %v1350 = vperm.slane %v708, %v1349
    %v1351 = vadd.s32 %v1349, 4294967288
    %v1352 = vperm.slane %v709, %v1351
    %vm1353 = vcmask 130112
    %v1354 = vsel %vm1353, %v1352, %v1350
    %v1355 = vadd.s32 %v1349, 4294967280
    %v1356 = vperm.slane %v710, %v1355
    %vm1357 = vcmask 195712
    %v1358 = vsel %vm1357, %v1356, %v1354
    %v1359 = vadd.s32 %v1349, 4294967272
    %v1360 = vperm.slane %v711, %v1359
    %vm1361 = vcmask 261312
    %v1362 = vsel %vm1361, %v1360, %v1358
    %v1363 = vadd.s32 %v1349, 4294967264
    %v1364 = vperm.slane %v712, %v1363
    %vm1365 = vcmask 326912
    %v1366 = vsel %vm1365, %v1364, %v1362
    %v1367 = vadd.s32 %v1349, 4294967256
    %v1368 = vperm.slane %v713, %v1367
    %vm1369 = vcmask 392512
    %v1370 = vsel %vm1369, %v1368, %v1366
    %v1371 = vadd.s32 %v1349, 4294967248
    %v1372 = vperm.slane %v714, %v1371
    %vm1373 = vcmask 458112
    %v1374 = vsel %vm1373, %v1372, %v1370
    %v1375 = vadd.s32 %v1349, 4294967240
    %v1376 = vperm.slane %v715, %v1375
    %vm1377 = vcmask 523712
    %v1378 = vsel %vm1377, %v1376, %v1374
    %v1379 = vadd.s32 %v1349, 4294967232
    %v1380 = vperm.slane %v716, %v1379
    %vm1381 = vcmask 589312
    %v1382 = vsel %vm1381, %v1380, %v1378
    %v1383 = vadd.s32 %v1349, 4294967224
    %v1384 = vperm.slane %v717, %v1383
    %vm1385 = vcmask 654912
    %v1386 = vsel %vm1385, %v1384, %v1382
    %v1387 = vadd.s32 %v1349, 4294967216
    %v1388 = vperm.slane %v718, %v1387
    %vm1389 = vcmask 720512
    %v1390 = vsel %vm1389, %v1388, %v1386
    %v1391 = vadd.s32 %v1349, 4294967208
    %v1392 = vperm.slane %v719, %v1391
    %vm1393 = vcmask 786112
    %v1394 = vsel %vm1393, %v1392, %v1390
    %v1395 = vadd.s32 %v1349, 4294967200
    %v1396 = vperm.slane %v720, %v1395
    %vm1397 = vcmask 851712
    %v1398 = vsel %vm1397, %v1396, %v1394
    %v1399 = vadd.s32 %v1349, 4294967192
    %v1400 = vperm.slane %v721, %v1399
    %vm1401 = vcmask 917312
    %v1402 = vsel %vm1401, %v1400, %v1398
    %v1403 = vadd.s32 %v1349, 4294967184
    %v1404 = vperm.slane %v722, %v1403
    %vm1405 = vcmask 982912
    %v1406 = vsel %vm1405, %v1404, %v1402
    %v1407 = vadd.s32 %v1349, 4294967176
    %v1408 = vperm.slane %v723, %v1407
    %vm1409 = vcmask 1048512
    %v1410 = vsel %vm1409, %v1408, %v1406
    %v1411 = vperm.slane %v724, %v1349
    %v1412 = vperm.slane %v725, %v1351
    %v1413 = vsel %vm1353, %v1412, %v1411
    %v1414 = vperm.slane %v726, %v1355
    %v1415 = vsel %vm1357, %v1414, %v1413
    %v1416 = vperm.slane %v727, %v1359
    %v1417 = vsel %vm1361, %v1416, %v1415
    %v1418 = vperm.slane %v728, %v1363
    %v1419 = vsel %vm1365, %v1418, %v1417
    %v1420 = vperm.slane %v729, %v1367
    %v1421 = vsel %vm1369, %v1420, %v1419
    %v1422 = vperm.slane %v730, %v1371
    %v1423 = vsel %vm1373, %v1422, %v1421
    %v1424 = vperm.slane %v731, %v1375
    %v1425 = vsel %vm1377, %v1424, %v1423
    %v1426 = vperm.slane %v732, %v1379
    %v1427 = vsel %vm1381, %v1426, %v1425
    %v1428 = vperm.slane %v733, %v1383
    %v1429 = vsel %vm1385, %v1428, %v1427
    %v1430 = vperm.slane %v734, %v1387
    %v1431 = vsel %vm1389, %v1430, %v1429
    %v1432 = vperm.slane %v735, %v1391
    %v1433 = vsel %vm1393, %v1432, %v1431
    %v1434 = vperm.slane %v736, %v1395
    %v1435 = vsel %vm1397, %v1434, %v1433
    %v1436 = vperm.slane %v737, %v1399
    %v1437 = vsel %vm1401, %v1436, %v1435
    %v1438 = vperm.slane %v738, %v1403
    %v1439 = vsel %vm1405, %v1438, %v1437
    %v1440 = vperm.slane %v739, %v1407
    %v1441 = vsel %vm1409, %v1440, %v1439
    %v1442 = vperm.slane %v740, %v1349
    %v1443 = vperm.slane %v741, %v1351
    %v1444 = vsel %vm1353, %v1443, %v1442
    %v1445 = vperm.slane %v742, %v1355
    %v1446 = vsel %vm1357, %v1445, %v1444
    %v1447 = vperm.slane %v743, %v1359
    %v1448 = vsel %vm1361, %v1447, %v1446
    %v1449 = vperm.slane %v744, %v1363
    %v1450 = vsel %vm1365, %v1449, %v1448
    %v1451 = vperm.slane %v745, %v1367
    %v1452 = vsel %vm1369, %v1451, %v1450
    %v1453 = vperm.slane %v746, %v1371
    %v1454 = vsel %vm1373, %v1453, %v1452
    %v1455 = vperm.slane %v747, %v1375
    %v1456 = vsel %vm1377, %v1455, %v1454
    %v1457 = vperm.slane %v748, %v1379
    %v1458 = vsel %vm1381, %v1457, %v1456
    %v1459 = vperm.slane %v749, %v1383
    %v1460 = vsel %vm1385, %v1459, %v1458
    %v1461 = vperm.slane %v750, %v1387
    %v1462 = vsel %vm1389, %v1461, %v1460
    %v1463 = vperm.slane %v751, %v1391
    %v1464 = vsel %vm1393, %v1463, %v1462
    %v1465 = vperm.slane %v752, %v1395
    %v1466 = vsel %vm1397, %v1465, %v1464
    %v1467 = vperm.slane %v753, %v1399
    %v1468 = vsel %vm1401, %v1467, %v1466
    %v1469 = vperm.slane %v754, %v1403
    %v1470 = vsel %vm1405, %v1469, %v1468
    %v1471 = vperm.slane %v755, %v1407
    %v1472 = vsel %vm1409, %v1471, %v1470
    %v1473 = vperm.slane %v756, %v1349
    %v1474 = vperm.slane %v757, %v1351
    %v1475 = vsel %vm1353, %v1474, %v1473
    %v1476 = vperm.slane %v758, %v1355
    %v1477 = vsel %vm1357, %v1476, %v1475
    %v1478 = vperm.slane %v759, %v1359
    %v1479 = vsel %vm1361, %v1478, %v1477
    %v1480 = vperm.slane %v760, %v1363
    %v1481 = vsel %vm1365, %v1480, %v1479
    %v1482 = vperm.slane %v761, %v1367
    %v1483 = vsel %vm1369, %v1482, %v1481
    %v1484 = vperm.slane %v762, %v1371
    %v1485 = vsel %vm1373, %v1484, %v1483
    %v1486 = vperm.slane %v763, %v1375
    %v1487 = vsel %vm1377, %v1486, %v1485
    %v1488 = vperm.slane %v764, %v1379
    %v1489 = vsel %vm1381, %v1488, %v1487
    %v1490 = vperm.slane %v765, %v1383
    %v1491 = vsel %vm1385, %v1490, %v1489
    %v1492 = vperm.slane %v766, %v1387
    %v1493 = vsel %vm1389, %v1492, %v1491
    %v1494 = vperm.slane %v767, %v1391
    %v1495 = vsel %vm1393, %v1494, %v1493
    %v1496 = vperm.slane %v768, %v1395
    %v1497 = vsel %vm1397, %v1496, %v1495
    %v1498 = vperm.slane %v769, %v1399
    %v1499 = vsel %vm1401, %v1498, %v1497
    %v1500 = vperm.slane %v770, %v1403
    %v1501 = vsel %vm1405, %v1500, %v1499
    %v1502 = vperm.slane %v771, %v1407
    %v1503 = vsel %vm1409, %v1502, %v1501
    %v1504 = vperm.slane %v772, %v1349
    %v1505 = vperm.slane %v773, %v1351
    %v1506 = vsel %vm1353, %v1505, %v1504
    %v1507 = vperm.slane %v774, %v1355
    %v1508 = vsel %vm1357, %v1507, %v1506
    %v1509 = vperm.slane %v775, %v1359
    %v1510 = vsel %vm1361, %v1509, %v1508
    %v1511 = vperm.slane %v776, %v1363
    %v1512 = vsel %vm1365, %v1511, %v1510
    %v1513 = vperm.slane %v777, %v1367
    %v1514 = vsel %vm1369, %v1513, %v1512
    %v1515 = vperm.slane %v778, %v1371
    %v1516 = vsel %vm1373, %v1515, %v1514
    %v1517 = vperm.slane %v779, %v1375
    %v1518 = vsel %vm1377, %v1517, %v1516
    %v1519 = vperm.slane %v780, %v1379
    %v1520 = vsel %vm1381, %v1519, %v1518
    %v1521 = vperm.slane %v781, %v1383
    %v1522 = vsel %vm1385, %v1521, %v1520
    %v1523 = vperm.slane %v782, %v1387
    %v1524 = vsel %vm1389, %v1523, %v1522
    %v1525 = vperm.slane %v783, %v1391
    %v1526 = vsel %vm1393, %v1525, %v1524
    %v1527 = vperm.slane %v784, %v1395
    %v1528 = vsel %vm1397, %v1527, %v1526
    %v1529 = vperm.slane %v785, %v1399
    %v1530 = vsel %vm1401, %v1529, %v1528
    %v1531 = vperm.slane %v786, %v1403
    %v1532 = vsel %vm1405, %v1531, %v1530
    %v1533 = vperm.slane %v787, %v1407
    %v1534 = vsel %vm1409, %v1533, %v1532
    %v1535 = vperm.slane %v788, %v1349
    %v1536 = vperm.slane %v789, %v1351
    %v1537 = vsel %vm1353, %v1536, %v1535
    %v1538 = vperm.slane %v790, %v1355
    %v1539 = vsel %vm1357, %v1538, %v1537
    %v1540 = vperm.slane %v791, %v1359
    %v1541 = vsel %vm1361, %v1540, %v1539
    %v1542 = vperm.slane %v792, %v1363
    %v1543 = vsel %vm1365, %v1542, %v1541
    %v1544 = vperm.slane %v793, %v1367
    %v1545 = vsel %vm1369, %v1544, %v1543
    %v1546 = vperm.slane %v794, %v1371
    %v1547 = vsel %vm1373, %v1546, %v1545
    %v1548 = vperm.slane %v795, %v1375
    %v1549 = vsel %vm1377, %v1548, %v1547
    %v1550 = vperm.slane %v796, %v1379
    %v1551 = vsel %vm1381, %v1550, %v1549
    %v1552 = vperm.slane %v797, %v1383
    %v1553 = vsel %vm1385, %v1552, %v1551
    %v1554 = vperm.slane %v798, %v1387
    %v1555 = vsel %vm1389, %v1554, %v1553
    %v1556 = vperm.slane %v799, %v1391
    %v1557 = vsel %vm1393, %v1556, %v1555
    %v1558 = vperm.slane %v800, %v1395
    %v1559 = vsel %vm1397, %v1558, %v1557
    %v1560 = vperm.slane %v801, %v1399
    %v1561 = vsel %vm1401, %v1560, %v1559
    %v1562 = vperm.slane %v802, %v1403
    %v1563 = vsel %vm1405, %v1562, %v1561
    %v1564 = vperm.slane %v803, %v1407
    %v1565 = vsel %vm1409, %v1564, %v1563
    %v1566 = vperm.slane %v804, %v1349
    %v1567 = vperm.slane %v805, %v1351
    %v1568 = vsel %vm1353, %v1567, %v1566
    %v1569 = vperm.slane %v806, %v1355
    %v1570 = vsel %vm1357, %v1569, %v1568
    %v1571 = vperm.slane %v807, %v1359
    %v1572 = vsel %vm1361, %v1571, %v1570
    %v1573 = vperm.slane %v808, %v1363
    %v1574 = vsel %vm1365, %v1573, %v1572
    %v1575 = vperm.slane %v809, %v1367
    %v1576 = vsel %vm1369, %v1575, %v1574
    %v1577 = vperm.slane %v810, %v1371
    %v1578 = vsel %vm1373, %v1577, %v1576
    %v1579 = vperm.slane %v811, %v1375
    %v1580 = vsel %vm1377, %v1579, %v1578
    %v1581 = vperm.slane %v812, %v1379
    %v1582 = vsel %vm1381, %v1581, %v1580
    %v1583 = vperm.slane %v813, %v1383
    %v1584 = vsel %vm1385, %v1583, %v1582
    %v1585 = vperm.slane %v814, %v1387
    %v1586 = vsel %vm1389, %v1585, %v1584
    %v1587 = vperm.slane %v815, %v1391
    %v1588 = vsel %vm1393, %v1587, %v1586
    %v1589 = vperm.slane %v816, %v1395
    %v1590 = vsel %vm1397, %v1589, %v1588
    %v1591 = vperm.slane %v817, %v1399
    %v1592 = vsel %vm1401, %v1591, %v1590
    %v1593 = vperm.slane %v818, %v1403
    %v1594 = vsel %vm1405, %v1593, %v1592
    %v1595 = vperm.slane %v819, %v1407
    %v1596 = vsel %vm1409, %v1595, %v1594
    %v1597 = vperm.slane %v820, %v1349
    %v1598 = vperm.slane %v821, %v1351
    %v1599 = vsel %vm1353, %v1598, %v1597
    %v1600 = vperm.slane %v822, %v1355
    %v1601 = vsel %vm1357, %v1600, %v1599
    %v1602 = vperm.slane %v823, %v1359
    %v1603 = vsel %vm1361, %v1602, %v1601
    %v1604 = vperm.slane %v824, %v1363
    %v1605 = vsel %vm1365, %v1604, %v1603
    %v1606 = vperm.slane %v825, %v1367
    %v1607 = vsel %vm1369, %v1606, %v1605
    %v1608 = vperm.slane %v826, %v1371
    %v1609 = vsel %vm1373, %v1608, %v1607
    %v1610 = vperm.slane %v827, %v1375
    %v1611 = vsel %vm1377, %v1610, %v1609
    %v1612 = vperm.slane %v828, %v1379
    %v1613 = vsel %vm1381, %v1612, %v1611
    %v1614 = vperm.slane %v829, %v1383
    %v1615 = vsel %vm1385, %v1614, %v1613
    %v1616 = vperm.slane %v830, %v1387
    %v1617 = vsel %vm1389, %v1616, %v1615
    %v1618 = vperm.slane %v831, %v1391
    %v1619 = vsel %vm1393, %v1618, %v1617
    %v1620 = vperm.slane %v832, %v1395
    %v1621 = vsel %vm1397, %v1620, %v1619
    %v1622 = vperm.slane %v833, %v1399
    %v1623 = vsel %vm1401, %v1622, %v1621
    %v1624 = vperm.slane %v834, %v1403
    %v1625 = vsel %vm1405, %v1624, %v1623
    %v1626 = vperm.slane %v835, %v1407
    %v1627 = vsel %vm1409, %v1626, %v1625
    %vm1628 = vcmask 1041409
    %v1629 = vsel %vm1628, %v1441, %v1410
    %vm1630 = vcmask 1042434
    %v1631 = vsel %vm1630, %v1472, %v1629
    %vm1632 = vcmask 1043459
    %v1633 = vsel %vm1632, %v1503, %v1631
    %vm1634 = vcmask 1044484
    %v1635 = vsel %vm1634, %v1534, %v1633
    %vm1636 = vcmask 1045509
    %v1637 = vsel %vm1636, %v1565, %v1635
    %vm1638 = vcmask 1046534
    %v1639 = vsel %vm1638, %v1596, %v1637
    %vm1640 = vcmask 1047559
    %v1641 = vsel %vm1640, %v1627, %v1639
    %v1771 = vperm.slane %v838, %v1349
    %v1772 = vperm.slane %v841, %v1351
    %v1773 = vsel %vm1353, %v1772, %v1771
    %v1774 = vperm.slane %v844, %v1355
    %v1775 = vsel %vm1357, %v1774, %v1773
    %v1776 = vperm.slane %v847, %v1359
    %v1777 = vsel %vm1361, %v1776, %v1775
    %v1778 = vperm.slane %v850, %v1363
    %v1779 = vsel %vm1365, %v1778, %v1777
    %v1780 = vperm.slane %v853, %v1367
    %v1781 = vsel %vm1369, %v1780, %v1779
    %v1782 = vperm.slane %v856, %v1371
    %v1783 = vsel %vm1373, %v1782, %v1781
    %v1784 = vperm.slane %v859, %v1375
    %v1785 = vsel %vm1377, %v1784, %v1783
    %v1786 = vperm.slane %v862, %v1379
    %v1787 = vsel %vm1381, %v1786, %v1785
    %v1788 = vperm.slane %v865, %v1383
    %v1789 = vsel %vm1385, %v1788, %v1787
    %v1790 = vperm.slane %v868, %v1387
    %v1791 = vsel %vm1389, %v1790, %v1789
    %v1792 = vperm.slane %v871, %v1391
    %v1793 = vsel %vm1393, %v1792, %v1791
    %v1794 = vperm.slane %v874, %v1395
    %v1795 = vsel %vm1397, %v1794, %v1793
    %v1796 = vperm.slane %v877, %v1399
    %v1797 = vsel %vm1401, %v1796, %v1795
    %v1798 = vperm.slane %v880, %v1403
    %v1799 = vsel %vm1405, %v1798, %v1797
    %v1800 = vperm.slane %v883, %v1407
    %v1801 = vsel %vm1409, %v1800, %v1799
    %v1802 = vperm.slane %v886, %v1349
    %v1803 = vperm.slane %v889, %v1351
    %v1804 = vsel %vm1353, %v1803, %v1802
    %v1805 = vperm.slane %v892, %v1355
    %v1806 = vsel %vm1357, %v1805, %v1804
    %v1807 = vperm.slane %v895, %v1359
    %v1808 = vsel %vm1361, %v1807, %v1806
    %v1809 = vperm.slane %v898, %v1363
    %v1810 = vsel %vm1365, %v1809, %v1808
    %v1811 = vperm.slane %v901, %v1367
    %v1812 = vsel %vm1369, %v1811, %v1810
    %v1813 = vperm.slane %v904, %v1371
    %v1814 = vsel %vm1373, %v1813, %v1812
    %v1815 = vperm.slane %v907, %v1375
    %v1816 = vsel %vm1377, %v1815, %v1814
    %v1817 = vperm.slane %v910, %v1379
    %v1818 = vsel %vm1381, %v1817, %v1816
    %v1819 = vperm.slane %v913, %v1383
    %v1820 = vsel %vm1385, %v1819, %v1818
    %v1821 = vperm.slane %v916, %v1387
    %v1822 = vsel %vm1389, %v1821, %v1820
    %v1823 = vperm.slane %v919, %v1391
    %v1824 = vsel %vm1393, %v1823, %v1822
    %v1825 = vperm.slane %v922, %v1395
    %v1826 = vsel %vm1397, %v1825, %v1824
    %v1827 = vperm.slane %v925, %v1399
    %v1828 = vsel %vm1401, %v1827, %v1826
    %v1829 = vperm.slane %v928, %v1403
    %v1830 = vsel %vm1405, %v1829, %v1828
    %v1831 = vperm.slane %v931, %v1407
    %v1832 = vsel %vm1409, %v1831, %v1830
    %v1833 = vperm.slane %v934, %v1349
    %v1834 = vperm.slane %v937, %v1351
    %v1835 = vsel %vm1353, %v1834, %v1833
    %v1836 = vperm.slane %v940, %v1355
    %v1837 = vsel %vm1357, %v1836, %v1835
    %v1838 = vperm.slane %v943, %v1359
    %v1839 = vsel %vm1361, %v1838, %v1837
    %v1840 = vperm.slane %v946, %v1363
    %v1841 = vsel %vm1365, %v1840, %v1839
    %v1842 = vperm.slane %v949, %v1367
    %v1843 = vsel %vm1369, %v1842, %v1841
    %v1844 = vperm.slane %v952, %v1371
    %v1845 = vsel %vm1373, %v1844, %v1843
    %v1846 = vperm.slane %v955, %v1375
    %v1847 = vsel %vm1377, %v1846, %v1845
    %v1848 = vperm.slane %v958, %v1379
    %v1849 = vsel %vm1381, %v1848, %v1847
    %v1850 = vperm.slane %v961, %v1383
    %v1851 = vsel %vm1385, %v1850, %v1849
    %v1852 = vperm.slane %v964, %v1387
    %v1853 = vsel %vm1389, %v1852, %v1851
    %v1854 = vperm.slane %v967, %v1391
    %v1855 = vsel %vm1393, %v1854, %v1853
    %v1856 = vperm.slane %v970, %v1395
    %v1857 = vsel %vm1397, %v1856, %v1855
    %v1858 = vperm.slane %v973, %v1399
    %v1859 = vsel %vm1401, %v1858, %v1857
    %v1860 = vperm.slane %v976, %v1403
    %v1861 = vsel %vm1405, %v1860, %v1859
    %v1862 = vperm.slane %v979, %v1407
    %v1863 = vsel %vm1409, %v1862, %v1861
    %v1864 = vperm.slane %v982, %v1349
    %v1865 = vperm.slane %v985, %v1351
    %v1866 = vsel %vm1353, %v1865, %v1864
    %v1867 = vperm.slane %v988, %v1355
    %v1868 = vsel %vm1357, %v1867, %v1866
    %v1869 = vperm.slane %v991, %v1359
    %v1870 = vsel %vm1361, %v1869, %v1868
    %v1871 = vperm.slane %v994, %v1363
    %v1872 = vsel %vm1365, %v1871, %v1870
    %v1873 = vperm.slane %v997, %v1367
    %v1874 = vsel %vm1369, %v1873, %v1872
    %v1875 = vperm.slane %v1000, %v1371
    %v1876 = vsel %vm1373, %v1875, %v1874
    %v1877 = vperm.slane %v1003, %v1375
    %v1878 = vsel %vm1377, %v1877, %v1876
    %v1879 = vperm.slane %v1006, %v1379
    %v1880 = vsel %vm1381, %v1879, %v1878
    %v1881 = vperm.slane %v1009, %v1383
    %v1882 = vsel %vm1385, %v1881, %v1880
    %v1883 = vperm.slane %v1012, %v1387
    %v1884 = vsel %vm1389, %v1883, %v1882
    %v1885 = vperm.slane %v1015, %v1391
    %v1886 = vsel %vm1393, %v1885, %v1884
    %v1887 = vperm.slane %v1018, %v1395
    %v1888 = vsel %vm1397, %v1887, %v1886
    %v1889 = vperm.slane %v1021, %v1399
    %v1890 = vsel %vm1401, %v1889, %v1888
    %v1891 = vperm.slane %v1024, %v1403
    %v1892 = vsel %vm1405, %v1891, %v1890
    %v1893 = vperm.slane %v1027, %v1407
    %v1894 = vsel %vm1409, %v1893, %v1892
    %v1895 = vperm.slane %v1030, %v1349
    %v1896 = vperm.slane %v1033, %v1351
    %v1897 = vsel %vm1353, %v1896, %v1895
    %v1898 = vperm.slane %v1036, %v1355
    %v1899 = vsel %vm1357, %v1898, %v1897
    %v1900 = vperm.slane %v1039, %v1359
    %v1901 = vsel %vm1361, %v1900, %v1899
    %v1902 = vperm.slane %v1042, %v1363
    %v1903 = vsel %vm1365, %v1902, %v1901
    %v1904 = vperm.slane %v1045, %v1367
    %v1905 = vsel %vm1369, %v1904, %v1903
    %v1906 = vperm.slane %v1048, %v1371
    %v1907 = vsel %vm1373, %v1906, %v1905
    %v1908 = vperm.slane %v1051, %v1375
    %v1909 = vsel %vm1377, %v1908, %v1907
    %v1910 = vperm.slane %v1054, %v1379
    %v1911 = vsel %vm1381, %v1910, %v1909
    %v1912 = vperm.slane %v1057, %v1383
    %v1913 = vsel %vm1385, %v1912, %v1911
    %v1914 = vperm.slane %v1060, %v1387
    %v1915 = vsel %vm1389, %v1914, %v1913
    %v1916 = vperm.slane %v1063, %v1391
    %v1917 = vsel %vm1393, %v1916, %v1915
    %v1918 = vperm.slane %v1066, %v1395
    %v1919 = vsel %vm1397, %v1918, %v1917
    %v1920 = vperm.slane %v1069, %v1399
    %v1921 = vsel %vm1401, %v1920, %v1919
    %v1922 = vperm.slane %v1072, %v1403
    %v1923 = vsel %vm1405, %v1922, %v1921
    %v1924 = vperm.slane %v1075, %v1407
    %v1925 = vsel %vm1409, %v1924, %v1923
    %v1926 = vperm.slane %v1078, %v1349
    %v1927 = vperm.slane %v1081, %v1351
    %v1928 = vsel %vm1353, %v1927, %v1926
    %v1929 = vperm.slane %v1084, %v1355
    %v1930 = vsel %vm1357, %v1929, %v1928
    %v1931 = vperm.slane %v1087, %v1359
    %v1932 = vsel %vm1361, %v1931, %v1930
    %v1933 = vperm.slane %v1090, %v1363
    %v1934 = vsel %vm1365, %v1933, %v1932
    %v1935 = vperm.slane %v1093, %v1367
    %v1936 = vsel %vm1369, %v1935, %v1934
    %v1937 = vperm.slane %v1096, %v1371
    %v1938 = vsel %vm1373, %v1937, %v1936
    %v1939 = vperm.slane %v1099, %v1375
    %v1940 = vsel %vm1377, %v1939, %v1938
    %v1941 = vperm.slane %v1102, %v1379
    %v1942 = vsel %vm1381, %v1941, %v1940
    %v1943 = vperm.slane %v1105, %v1383
    %v1944 = vsel %vm1385, %v1943, %v1942
    %v1945 = vperm.slane %v1108, %v1387
    %v1946 = vsel %vm1389, %v1945, %v1944
    %v1947 = vperm.slane %v1111, %v1391
    %v1948 = vsel %vm1393, %v1947, %v1946
    %v1949 = vperm.slane %v1114, %v1395
    %v1950 = vsel %vm1397, %v1949, %v1948
    %v1951 = vperm.slane %v1117, %v1399
    %v1952 = vsel %vm1401, %v1951, %v1950
    %v1953 = vperm.slane %v1120, %v1403
    %v1954 = vsel %vm1405, %v1953, %v1952
    %v1955 = vperm.slane %v1123, %v1407
    %v1956 = vsel %vm1409, %v1955, %v1954
    %v1957 = vperm.slane %v1126, %v1349
    %v1958 = vperm.slane %v1129, %v1351
    %v1959 = vsel %vm1353, %v1958, %v1957
    %v1960 = vperm.slane %v1132, %v1355
    %v1961 = vsel %vm1357, %v1960, %v1959
    %v1962 = vperm.slane %v1135, %v1359
    %v1963 = vsel %vm1361, %v1962, %v1961
    %v1964 = vperm.slane %v1138, %v1363
    %v1965 = vsel %vm1365, %v1964, %v1963
    %v1966 = vperm.slane %v1141, %v1367
    %v1967 = vsel %vm1369, %v1966, %v1965
    %v1968 = vperm.slane %v1144, %v1371
    %v1969 = vsel %vm1373, %v1968, %v1967
    %v1970 = vperm.slane %v1147, %v1375
    %v1971 = vsel %vm1377, %v1970, %v1969
    %v1972 = vperm.slane %v1150, %v1379
    %v1973 = vsel %vm1381, %v1972, %v1971
    %v1974 = vperm.slane %v1153, %v1383
    %v1975 = vsel %vm1385, %v1974, %v1973
    %v1976 = vperm.slane %v1156, %v1387
    %v1977 = vsel %vm1389, %v1976, %v1975
    %v1978 = vperm.slane %v1159, %v1391
    %v1979 = vsel %vm1393, %v1978, %v1977
    %v1980 = vperm.slane %v1162, %v1395
    %v1981 = vsel %vm1397, %v1980, %v1979
    %v1982 = vperm.slane %v1165, %v1399
    %v1983 = vsel %vm1401, %v1982, %v1981
    %v1984 = vperm.slane %v1168, %v1403
    %v1985 = vsel %vm1405, %v1984, %v1983
    %v1986 = vperm.slane %v1171, %v1407
    %v1987 = vsel %vm1409, %v1986, %v1985
    %v1988 = vperm.slane %v1174, %v1349
    %v1989 = vperm.slane %v1177, %v1351
    %v1990 = vsel %vm1353, %v1989, %v1988
    %v1991 = vperm.slane %v1180, %v1355
    %v1992 = vsel %vm1357, %v1991, %v1990
    %v1993 = vperm.slane %v1183, %v1359
    %v1994 = vsel %vm1361, %v1993, %v1992
    %v1995 = vperm.slane %v1186, %v1363
    %v1996 = vsel %vm1365, %v1995, %v1994
    %v1997 = vperm.slane %v1189, %v1367
    %v1998 = vsel %vm1369, %v1997, %v1996
    %v1999 = vperm.slane %v1192, %v1371
    %v2000 = vsel %vm1373, %v1999, %v1998
    %v2001 = vperm.slane %v1195, %v1375
    %v2002 = vsel %vm1377, %v2001, %v2000
    %v2003 = vperm.slane %v1198, %v1379
    %v2004 = vsel %vm1381, %v2003, %v2002
    %v2005 = vperm.slane %v1201, %v1383
    %v2006 = vsel %vm1385, %v2005, %v2004
    %v2007 = vperm.slane %v1204, %v1387
    %v2008 = vsel %vm1389, %v2007, %v2006
    %v2009 = vperm.slane %v1207, %v1391
    %v2010 = vsel %vm1393, %v2009, %v2008
    %v2011 = vperm.slane %v1210, %v1395
    %v2012 = vsel %vm1397, %v2011, %v2010
    %v2013 = vperm.slane %v1213, %v1399
    %v2014 = vsel %vm1401, %v2013, %v2012
    %v2015 = vperm.slane %v1216, %v1403
    %v2016 = vsel %vm1405, %v2015, %v2014
    %v2017 = vperm.slane %v1219, %v1407
    %v2018 = vsel %vm1409, %v2017, %v2016
    %v2019 = vsel %vm1628, %v1832, %v1801
    %v2020 = vsel %vm1630, %v1863, %v2019
    %v2021 = vsel %vm1632, %v1894, %v2020
    %v2022 = vsel %vm1634, %v1925, %v2021
    %v2023 = vsel %vm1636, %v1956, %v2022
    %v2024 = vsel %vm1638, %v1987, %v2023
    %v2025 = vsel %vm1640, %v2018, %v2024
    %v2027 = vld [vmem:[#allocation5] sm:$0xff]
    %v2028 = vld [vmem:[#allocation5 + $0x8] sm:$0xff]
    %v2029 = vld [vmem:[#allocation5 + $0x10] sm:$0xff]
    %v2030 = vld [vmem:[#allocation5 + $0x18] sm:$0xff]
    %v2031 = vld [vmem:[#allocation5 + $0x20] sm:$0xff]
    %v2032 = vld [vmem:[#allocation5 + $0x28] sm:$0xff]
    %v2033 = vld [vmem:[#allocation5 + $0x30] sm:$0xff]
    %v2034 = vld [vmem:[#allocation5 + $0x38] sm:$0xff]
    %v2035 = vld [vmem:[#allocation5 + $0x40] sm:$0xff]
    %v2036 = vld [vmem:[#allocation5 + $0x48] sm:$0xff]
    %v2037 = vld [vmem:[#allocation5 + $0x50] sm:$0xff]
    %v2038 = vld [vmem:[#allocation5 + $0x58] sm:$0xff]
    %v2039 = vld [vmem:[#allocation5 + $0x60] sm:$0xff]
    %v2040 = vld [vmem:[#allocation5 + $0x68] sm:$0xff]
    %v2041 = vld [vmem:[#allocation5 + $0x70] sm:$0xff]
    %v2042 = vld [vmem:[#allocation5 + $0x78] sm:$0xff]
    %v2043 = vld [vmem:[%s2] sm:$0x1]
    %v2045 = vperm.slane %v2043, 0
    %2047 = vmatpush.msra.mxu0 %v2042
    %2048 = vmatpush.msra.mxu0 %v2041
    %2049 = vmatpush.msra.mxu0 %v2040
    %2050 = vmatpush.msra.mxu0 %v2039
    %2051 = vmatpush.msra.mxu0 %v2038
    %2052 = vmatpush.msra.mxu0 %v2037
    %2053 = vmatpush.msra.mxu0 %v2036
    %2054 = vmatpush.msra.mxu0 %v2035
    %2055 = vmatpush.msra.mxu0 %v2034
    %2056 = vmatpush.msra.mxu0 %v2033
    %2057 = vmatpush.msra.mxu0 %v2032
    %2058 = vmatpush.msra.mxu0 %v2031
    %2059 = vmatpush.msra.mxu0 %v2030
    %2060 = vmatpush.msra.mxu0 %v2029
    %2061 = vmatpush.msra.mxu0 %v2028
    %2062 = vmatpush.msra.mxu0 %v2027
    %2063 = vmatmul.f32.gmra.mxu0 %v1641
    %v2064 = vpop.f32.mrf.mxu0
    %v2065 = vadd.f32 %v2045, %v2064
    %2066 = vmatmul.f32.gmra.mxu0 %v2025
    %v2067 = vpop.f32.mrf.mxu0
    %v2068 = vadd.f32 %v2045, %v2067
    %2069 = vdwg.mxu0
    %v2070 = vmax.f32 %v2065, 0.0
    %v2071 = vmax.f32 %v2068, 0.0
    %v2072 = vld [vmem:[#allocation7] sm:$0xff]
    %v2073 = vld [vmem:[#allocation7 + $0x8] sm:$0xff]
    %v2074 = vld [vmem:[#allocation7 + $0x10] sm:$0xff]
    %v2075 = vld [vmem:[#allocation7 + $0x18] sm:$0xff]
    %v2076 = vld [vmem:[#allocation7 + $0x20] sm:$0xff]
    %v2077 = vld [vmem:[#allocation7 + $0x28] sm:$0xff]
    %v2078 = vld [vmem:[#allocation7 + $0x30] sm:$0xff]
    %v2079 = vld [vmem:[#allocation7 + $0x38] sm:$0xff]
    %v2080 = vld [vmem:[#allocation7 + $0x40] sm:$0xff]
    %v2081 = vld [vmem:[#allocation7 + $0x48] sm:$0xff]
    %v2082 = vld [vmem:[#allocation7 + $0x50] sm:$0xff]
    %v2083 = vld [vmem:[#allocation7 + $0x58] sm:$0xff]
    %v2084 = vld [vmem:[#allocation7 + $0x60] sm:$0xff]
    %v2085 = vld [vmem:[#allocation7 + $0x68] sm:$0xff]
    %v2086 = vld [vmem:[#allocation7 + $0x70] sm:$0xff]
    %v2087 = vld [vmem:[#allocation7 + $0x78] sm:$0xff]
    %v2088 = vld [vmem:[%s4] sm:$0x1]
    %v2090 = vperm.slane %v2088, 0
    %2092 = vmatpush.msra.mxu0 %v2087
    %2093 = vmatpush.msra.mxu0 %v2086
    %2094 = vmatpush.msra.mxu0 %v2085
    %2095 = vmatpush.msra.mxu0 %v2084
    %2096 = vmatpush.msra.mxu0 %v2083
    %2097 = vmatpush.msra.mxu0 %v2082
    %2098 = vmatpush.msra.mxu0 %v2081
    %2099 = vmatpush.msra.mxu0 %v2080
    %2100 = vmatpush.msra.mxu0 %v2079
    %2101 = vmatpush.msra.mxu0 %v2078
    %2102 = vmatpush.msra.mxu0 %v2077
    %2103 = vmatpush.msra.mxu0 %v2076
    %2104 = vmatpush.msra.mxu0 %v2075
    %2105 = vmatpush.msra.mxu0 %v2074
    %2106 = vmatpush.msra.mxu0 %v2073
    %2107 = vmatpush.msra.mxu0 %v2072
    %2108 = vmatmul.f32.gmra.mxu0 %v2070
    %v2109 = vpop.f32.mrf.mxu0
    %v2110 = vadd.f32 %v2090, %v2109
    %2111 = vmatmul.f32.gmra.mxu0 %v2071
    %v2112 = vpop.f32.mrf.mxu0
    %v2113 = vadd.f32 %v2090, %v2112
    %2114 = vdwg.mxu0
    %v2115 = vadd.f32 %v2110, %v2113
    %v2116 = vxor.u32 %v2115, 2147483648
    %v2117 = vmul.f32 %v2116, 1.442695
    %v2118 = vpow.pop %v2117
    %v2119 = vadd.f32 %v2118, 1.0
    %v2120 = vrcp.pop %v2119
    %v2121 = vmul.f32 %v2119, %v2120
    %v2122 = vsub.f32 1.0, %v2121
    %v2123 = vmul.f32 %v2120, %v2122
    %v2124 = vadd.f32 %v2120, %v2123
    %vm2125 = vweird.f32 %v2119
    %vm2126 = vweird.f32 %v2120
    %vm2127 = vmor %vm2125, %vm2126
    %v2128 = vsel %vm2127, %v2120, %v2124
    %v2129 = vand.u32 2147483647, %v2119
    %vm2130 = vcmp.eq.f32.partialorder %v2129, 8.507059e+37
    %v2131 = vand.u32 %v2119, 2147483648
    %v2132 = vor.u32 1.1754944e-38, %v2131
    %v2133 = vsel %vm2130, %v2132, %v2128
    %v2134 = vmul.f32 1.0, %v2133
    %2135 = vst [vmem:[#allocation8] sm:$0xff] %v2134
    // Predicated region
    $region34: #{tpu_custom_call.1} parent=1 // pred_check
      _
    $region35: #{tpu_custom_call.1} parent=1 // pred_check_branch
      %2137 = sbr.rel (0) target = $region37
    $region36: #{tpu_custom_call.1} parent=1 // pred_region
      %2139 = vsyncadd [#allocation4], 0
      %s2141 = sshll.u32 [#allocation8], 4
      %s2142 = int_to_ptr.vmem [resolvable:$true] %s2141
      %s2143 = sshll.u32 %s5, 4
      %s2144 = int_to_ptr.hbm [resolvable:$true] %s2143
      %2146 = dma.vmem_to_hbm [thread:$0]  %s2142, 128, %s2144, [#allocation4]
    $region37: #{tpu_custom_call.1} parent=1 // pred_fallthru
      _
    // Predicated region
    $region38: #{tpu_custom_call.1} parent=1 // pred_check
      _
    $region39: #{tpu_custom_call.1} parent=1 // pred_check_branch
      %2148 = sbr.rel (0) target = $region41
    $region40: #{tpu_custom_call.1} parent=1 // pred_region
      %2150 = dma.done [#allocation4], 128
    $region41: #{tpu_custom_call.1} parent=1 // pred_fallthru
      _
    %2151 = vsyncpa [#allocation3], 1
    %2152 = vsyncpa [#allocation6], 1
    %2153 = vsyncpa [#allocation4], 1

</llo_original>
